<compile_context>
chip_gen: v7x
topology: tpu7x:2x2x1
jax: 0.10.0
libtpu: 0.0.40
codegen_flags: <defaults>
</compile_context>

<pallas_src>
import math
import functools

import jax
import jax.numpy as jnp
from jax.experimental import pallas as pl
from jax.experimental.pallas import tpu as pltpu

# Explicit scoped-VMEM cap with headroom; stays within v7x's 64 MiB physical VMEM.
_VMEM_LIMIT = 64 * 1024 * 1024


# --------------------------- tiling helpers ---------------------------------

def _pick_tile(dim, max_tile, align):
    """Largest aligned divisor of `dim` that is <= max_tile; full dim if it already fits.
    TODO(synk): falls back to the full dim when no aligned divisor exists."""
    if dim <= max_tile:
        return dim
    t = (max_tile // align) * align
    while t >= align:
        if dim % t == 0:
            return t
        t -= align
    return dim


def _row_tile(dim, max_tile, align):
    """Row (parallel-axis) tile: prefer >=2 blocks so v7x's second TensorCore gets work."""
    t = _pick_tile(dim, max_tile, align)
    if t == dim and t % (2 * align) == 0:
        t //= 2
    return t


# ------------------------------ Pallas kernels ------------------------------

def _linear_kernel(x_ref, w_ref, b_ref, o_ref, acc_ref):
    """o = x @ w + b; bf16 operands, f32 accumulation, bf16 output."""
    k = pl.program_id(2)

    @pl.when(k == 0)
    def _():
        acc_ref[...] = jnp.broadcast_to(b_ref[...], acc_ref.shape)

    acc_ref[...] += jnp.dot(x_ref[...], w_ref[...],
                            preferred_element_type=jnp.float32)

    @pl.when(k == pl.num_programs(2) - 1)
    def _():
        o_ref[...] = acc_ref[...].astype(o_ref.dtype)


def _linear_res_ln_kernel(x_ref, w_ref, b_ref, res_ref, g_ref, bt_ref,
                          o_ref, acc_ref, *, eps):
    """o = LayerNorm(x @ w + b + res) * g + bt (LN fused into the matmul epilogue)."""
    k = pl.program_id(1)

    @pl.when(k == 0)
    def _():
        acc_ref[...] = res_ref[...].astype(jnp.float32) + b_ref[...]

    acc_ref[...] += jnp.dot(x_ref[...], w_ref[...],
                            preferred_element_type=jnp.float32)

    @pl.when(k == pl.num_programs(1) - 1)
    def _():
        y = acc_ref[...]
        mu = jnp.mean(y, axis=-1, keepdims=True)
        var = jnp.mean((y - mu) * (y - mu), axis=-1, keepdims=True)
        o_ref[...] = ((y - mu) * jax.lax.rsqrt(var + eps) * g_ref[...]
                      + bt_ref[...]).astype(o_ref.dtype)


def _ffn_res_ln_kernel(x_ref, w1_ref, b1_ref, w2_ref, b2_ref, g_ref, bt_ref,
                       o_ref, acc_ref, *, eps):
    """Fused FFN: o = LayerNorm(x + relu(x@W1+b1)@W2 + b2) * g + bt.
    d_ff is looped in blocks on the 'arbitrary' grid axis; the (M, d_ff)
    intermediate stays in VMEM."""
    f = pl.program_id(1)

    @pl.when(f == 0)
    def _():
        acc_ref[...] = x_ref[...].astype(jnp.float32) + b2_ref[...]

    h = jnp.dot(x_ref[...], w1_ref[...], preferred_element_type=jnp.float32)
    h = jnp.maximum(h + b1_ref[...], 0.0)
    acc_ref[...] += jnp.dot(h.astype(jnp.bfloat16), w2_ref[...],
                            preferred_element_type=jnp.float32)

    @pl.when(f == pl.num_programs(1) - 1)
    def _():
        y = acc_ref[...]
        mu = jnp.mean(y, axis=-1, keepdims=True)
        var = jnp.mean((y - mu) * (y - mu), axis=-1, keepdims=True)
        o_ref[...] = ((y - mu) * jax.lax.rsqrt(var + eps) * g_ref[...]
                      + bt_ref[...]).astype(o_ref.dtype)


def _flash_attn_kernel(q_ref, k_ref, v_ref, o_ref, m_sc, l_sc, acc_sc,
                       *, n_head, scale):
    """Flash-style MHA: all heads batched in one contraction per grid step,
    online softmax over K blocks, one lane-dense (tq, H*d_v) store in the epilogue."""
    kb = pl.program_id(2)

    @pl.when(kb == 0)
    def _():
        m_sc[...] = jnp.full_like(m_sc, -jnp.inf)
        l_sc[...] = jnp.zeros_like(l_sc)
        acc_sc[...] = jnp.zeros_like(acc_sc)

    q = q_ref[0]      # (H, tq,  d_k)  bf16
    k = k_ref[0]      # (H, tkb, d_k)  bf16
    v = v_ref[0]      # (H, tkb, d_v)  bf16

    s = jnp.einsum("hqd,hkd->hqk", q, k,
                   preferred_element_type=jnp.float32) * scale       # (H, tq, tkb) f32
    m_prev = m_sc[...]
    m_new = jnp.maximum(m_prev, jnp.max(s, axis=-1, keepdims=True))
    alpha = jnp.exp(m_prev - m_new)
    p = jnp.exp(s - m_new)
    l_sc[...] = alpha * l_sc[...] + jnp.sum(p, axis=-1, keepdims=True)
    acc_sc[...] = alpha * acc_sc[...] + jnp.einsum(
        "hqk,hkd->hqd", p.astype(jnp.bfloat16), v,
        preferred_element_type=jnp.float32)
    m_sc[...] = m_new

    @pl.when(kb == pl.num_programs(2) - 1)
    def _():
        o = acc_sc[...] / l_sc[...]                  # exact normalization (H, tq, d_v)
        # single full-width lane-dense store instead of per-head 32-lane stores
        o_ref[0] = jnp.concatenate(
            [o[h] for h in range(n_head)], axis=-1).astype(o_ref.dtype)


# ------------------------------ wrappers ------------------------------------

def pallas_linear(x, w, b, *, tm_max=512, tn_max=512, tk_max=512):
    """(M, K) bf16 @ (K, N) bf16 + b -> (M, N) bf16."""
    M, K = x.shape
    N = w.shape[1]
    tm = _row_tile(M, tm_max, 16)
    tn = _pick_tile(N, tn_max, 128)
    tk = _pick_tile(K, tk_max, 128)
    grid = (M // tm, N // tn, K // tk)
    return pl.pallas_call(
        _linear_kernel,
        out_shape=jax.ShapeDtypeStruct((M, N), jnp.bfloat16),
        grid_spec=pltpu.PrefetchScalarGridSpec(
            num_scalar_prefetch=0,
            grid=grid,
            in_specs=[
                pl.BlockSpec((tm, tk), lambda i, j, k: (i, k)),
                pl.BlockSpec((tk, tn), lambda i, j, k: (k, j)),
                pl.BlockSpec((1, tn), lambda i, j, k: (0, j)),
            ],
            out_specs=pl.BlockSpec((tm, tn), lambda i, j, k: (i, j)),
            scratch_shapes=[pltpu.VMEM((tm, tn), jnp.float32)]),
        compiler_params=pltpu.CompilerParams(
            dimension_semantics=("parallel", "parallel", "arbitrary"),
            vmem_limit_bytes=_VMEM_LIMIT),
    )(x, w, b)


def pallas_linear_res_ln(x, w, b, res, gamma, beta, *, eps=1e-5,
                         tm_max=512, tk_max=512):
    """LayerNorm((M,K)@(K,N) + b + res) * gamma + beta -> (M, N) bf16 (fused epilogue)."""
    M, K = x.shape
    N = w.shape[1]
    tm = _row_tile(M, tm_max, 16)
    tk = _pick_tile(K, tk_max, 128)
    grid = (M // tm, K // tk)
    return pl.pallas_call(
        functools.partial(_linear_res_ln_kernel, eps=eps),
        out_shape=jax.ShapeDtypeStruct((M, N), jnp.bfloat16),
        grid_spec=pltpu.PrefetchScalarGridSpec(
            num_scalar_prefetch=0,
            grid=grid,
            in_specs=[
                pl.BlockSpec((tm, tk), lambda i, k: (i, k)),
                pl.BlockSpec((tk, N), lambda i, k: (k, 0)),
                pl.BlockSpec((1, N), lambda i, k: (0, 0)),
                pl.BlockSpec((tm, N), lambda i, k: (i, 0)),
                pl.BlockSpec((1, N), lambda i, k: (0, 0)),
                pl.BlockSpec((1, N), lambda i, k: (0, 0)),
            ],
            out_specs=pl.BlockSpec((tm, N), lambda i, k: (i, 0)),
            scratch_shapes=[pltpu.VMEM((tm, N), jnp.float32)]),
        compiler_params=pltpu.CompilerParams(
            dimension_semantics=("parallel", "arbitrary"),
            vmem_limit_bytes=_VMEM_LIMIT),
    )(x, w, b, res, gamma, beta)


def pallas_ffn_res_ln(x, w1, b1, w2, b2, gamma, beta, *, eps=1e-5,
                      tm_max=512, tf_max=512):
    """LayerNorm(x + relu(x@W1+b1)@W2 + b2) * gamma + beta, fully fused."""
    M, D = x.shape
    F = w1.shape[1]
    tm = _row_tile(M, tm_max, 16)
    tf = _pick_tile(F, tf_max, 128)
    grid = (M // tm, F // tf)
    return pl.pallas_call(
        functools.partial(_ffn_res_ln_kernel, eps=eps),
        out_shape=jax.ShapeDtypeStruct((M, D), jnp.bfloat16),
        grid_spec=pltpu.PrefetchScalarGridSpec(
            num_scalar_prefetch=0,
            grid=grid,
            in_specs=[
                pl.BlockSpec((tm, D), lambda i, f: (i, 0)),   # x (also the residual)
                pl.BlockSpec((D, tf), lambda i, f: (0, f)),   # W1 column block
                pl.BlockSpec((1, tf), lambda i, f: (0, f)),   # b1 block
                pl.BlockSpec((tf, D), lambda i, f: (f, 0)),   # W2 row block
                pl.BlockSpec((1, D), lambda i, f: (0, 0)),    # b2
                pl.BlockSpec((1, D), lambda i, f: (0, 0)),    # ln gamma
                pl.BlockSpec((1, D), lambda i, f: (0, 0)),    # ln beta
            ],
            out_specs=pl.BlockSpec((tm, D), lambda i, f: (i, 0)),
            scratch_shapes=[pltpu.VMEM((tm, D), jnp.float32)]),
        compiler_params=pltpu.CompilerParams(
            dimension_semantics=("parallel", "arbitrary"),
            vmem_limit_bytes=_VMEM_LIMIT),
    )(x, w1, b1, w2, b2, gamma, beta)


def pallas_attention(q, k, v, *, tq_max=256, tkb_max=512):
    """q, k, v: (B, H, n, d) bf16 head-major.  Returns (B, n, H*d_v) bf16, lane-dense."""
    B, H, n, d_k = q.shape
    d_v = v.shape[-1]
    tq = _row_tile(n, tq_max, 16)
    tkb = _pick_tile(n, tkb_max, 128)
    grid = (B, n // tq, n // tkb)
    scale = 1.0 / math.sqrt(d_k)
    return pl.pallas_call(
        functools.partial(_flash_attn_kernel, n_head=H, scale=scale),
        out_shape=jax.ShapeDtypeStruct((B, n, H * d_v), jnp.bfloat16),
        grid_spec=pltpu.PrefetchScalarGridSpec(
            num_scalar_prefetch=0,
            grid=grid,
            in_specs=[
                pl.BlockSpec((1, H, tq, d_k), lambda b, qi, kb: (b, 0, qi, 0)),
                pl.BlockSpec((1, H, tkb, d_k), lambda b, qi, kb: (b, 0, kb, 0)),
                pl.BlockSpec((1, H, tkb, d_v), lambda b, qi, kb: (b, 0, kb, 0)),
            ],
            out_specs=pl.BlockSpec((1, tq, H * d_v), lambda b, qi, kb: (b, qi, 0)),
            scratch_shapes=[pltpu.VMEM((H, tq, 1), jnp.float32),   # running max
                            pltpu.VMEM((H, tq, 1), jnp.float32),   # running sum
                            pltpu.VMEM((H, tq, d_v), jnp.float32)]),  # acc
        compiler_params=pltpu.CompilerParams(
            dimension_semantics=("parallel", "parallel", "arbitrary"),
            vmem_limit_bytes=_VMEM_LIMIT),
    )(q, k, v)


# ------------------------- Transformer encoder ------------------------------

def init_layer_params(key, d_model, d_k, d_v, d_ff, n_head):
    ks = jax.random.split(key, 6)
    s = 0.05
    wq = jax.random.normal(ks[0], (d_model, n_head * d_k), jnp.float32) * s
    wk = jax.random.normal(ks[1], (d_model, n_head * d_k), jnp.float32) * s
    wv = jax.random.normal(ks[2], (d_model, n_head * d_v), jnp.float32) * s
    return {
        # QKV projections fused along the output dim; weights stored bf16 for the MXU.
        "w_qkv": jnp.concatenate([wq, wk, wv], axis=1).astype(jnp.bfloat16),
        "b_qkv": jnp.zeros((1, n_head * (2 * d_k + d_v)), jnp.float32),
        "wo": (jax.random.normal(ks[3], (n_head * d_v, d_model), jnp.float32) * s
               ).astype(jnp.bfloat16),
        "bo": jnp.zeros((1, d_model), jnp.float32),
        "w1": (jax.random.normal(ks[4], (d_model, d_ff), jnp.float32) * s
               ).astype(jnp.bfloat16),
        "b1": jnp.zeros((1, d_ff), jnp.float32),
        "w2": (jax.random.normal(ks[5], (d_ff, d_model), jnp.float32) * s
               ).astype(jnp.bfloat16),
        "b2": jnp.zeros((1, d_model), jnp.float32),
        "ln1_g": jnp.ones((1, d_model), jnp.float32),
        "ln1_b": jnp.zeros((1, d_model), jnp.float32),
        "ln2_g": jnp.ones((1, d_model), jnp.float32),
        "ln2_b": jnp.zeros((1, d_model), jnp.float32),
    }


def encoder_layer(x2, p, B, n, n_head, d_k, d_v):
    M, d_model = x2.shape

    # fused Q|K|V projection: x read from HBM once, bias folded into the acc init
    qkv = pallas_linear(x2, p["w_qkv"], p["b_qkv"])              # (M, 3*H*d_k) bf16

    # head-major layout for attention (layout plumbing only, single XLA transpose)
    qkv = qkv.reshape(B, n, 3, n_head, d_k).transpose(2, 0, 3, 1, 4)
    q, k, v = qkv[0], qkv[1], qkv[2]                             # (B, H, n, d) each

    # flash-style multi-head attention -> lane-dense (B, n, H*d_v) bf16
    attn = pallas_attention(q, k, v).reshape(M, n_head * d_v)

    # output projection + residual + LayerNorm1 (fused epilogue)
    x2 = pallas_linear_res_ln(attn, p["wo"], p["bo"], x2, p["ln1_g"], p["ln1_b"])

    # fused position-wise FFN + residual + LayerNorm2 ((M, d_ff) never hits HBM)
    x2 = pallas_ffn_res_ln(x2, p["w1"], p["b1"], p["w2"], p["b2"],
                           p["ln2_g"], p["ln2_b"])
    return x2


@functools.partial(jax.jit, static_argnames=("n_head", "d_k", "d_v"))
def transformer_encoder(x, params, *, n_head, d_k, d_v):
    assert d_k == d_v, "fused QKV column layout assumes d_k == d_v"
    B, n, d_model = x.shape
    M = B * n
    x2 = x.astype(jnp.bfloat16).reshape(M, d_model)   # bf16 residual stream in HBM
    for p in params:
        x2 = encoder_layer(x2, p, B, n, n_head, d_k, d_v)
    return x2.reshape(B, n, d_model).astype(jnp.float32)


# ------------------------------ main ----------------------------------------

if __name__ == "__main__":
    n_layer, d_model, d_ff, n_head = 2, 32, 64, 4
    d_k = d_v = d_model   # matches TransformerEncoderLayer(d_model, d_model, d_model, ...)
    B, n = 2, 8

    root = jax.random.PRNGKey(0)
    kx, *layer_keys = jax.random.split(root, n_layer + 1)
    x = jax.random.normal(kx, (B, n, d_model), jnp.float32)
    params = [
        init_layer_params(layer_keys[i], d_model, d_k, d_v, d_ff, n_head)
        for i in range(n_layer)
    ]

    out = transformer_encoder(x, params, n_head=n_head, d_k=d_k, d_v=d_v)
    out = jax.block_until_ready(out)
    assert out.shape == (B, n, d_model)
    assert out.dtype == jnp.float32
    assert bool(jnp.all(jnp.isfinite(out)))
    print("KERNEL_OK")
</pallas_src>

<mosaic_0001>
module attributes {stable_mosaic.version = 11 : i64} {
  func.func @_linear_kernel(%arg0: i32, %arg1: i32, %arg2: i32, %arg3: memref<16x32xbf16, #tpu.memory_space<vmem>>, %arg4: memref<32x384xbf16, #tpu.memory_space<vmem>>, %arg5: memref<1x384xf32, #tpu.memory_space<vmem>>, %arg6: memref<16x384xbf16, #tpu.memory_space<vmem>>, %arg7: memref<16x384xf32, #tpu.memory_space<vmem>>) attributes {dimension_semantics = [#tpu.dimension_semantics<parallel>, #tpu.dimension_semantics<parallel>, #tpu.dimension_semantics<arbitrary>], iteration_bounds = array<i64: 1, 1, 1>, scalar_prefetch = 0 : i64, scratch_operands = 1 : i64, tpu.core_type = #tpu.core_type<tc>, window_params = [{transform_indices = @transform_0, window_bounds = array<i64: 16, 32>}, {transform_indices = @transform_1, window_bounds = array<i64: 32, 384>}, {transform_indices = @transform_2, window_bounds = array<i64: 1, 384>}, {transform_indices = @transform_3, window_bounds = array<i64: 16, 384>}]} {
    %c0_i32 = arith.constant 0 : i32
    %0 = arith.cmpi eq, %arg2, %c0_i32 : i32
    %1 = arith.extui %0 : i1 to i32
    %c0_i32_0 = arith.constant 0 : i32
    %2 = arith.cmpi ne, %1, %c0_i32_0 : i32
    scf.if %2 {
      %c0_10 = arith.constant 0 : index
      %c0_11 = arith.constant 0 : index
      %12 = vector.load %arg5[%c0_10, %c0_11] : memref<1x384xf32, #tpu.memory_space<vmem>>, vector<1x384xf32>
      %13 = vector.shape_cast %12 : vector<1x384xf32> to vector<1x384xf32>
      %14 = vector.broadcast %13 : vector<1x384xf32> to vector<16x384xf32>
      %c0_12 = arith.constant 0 : index
      %c0_13 = arith.constant 0 : index
      %15 = vector.load %arg7[%c0_12, %c0_13] : memref<16x384xf32, #tpu.memory_space<vmem>>, vector<16x384xf32>
      tpu.vector_store %arg7[%c0_12, %c0_13], %14 {strides = array<i32>} : memref<16x384xf32, #tpu.memory_space<vmem>>, vector<16x384xf32>,
    } else {
    }
    %c0 = arith.constant 0 : index
    %c0_1 = arith.constant 0 : index
    %3 = vector.load %arg7[%c0, %c0_1] : memref<16x384xf32, #tpu.memory_space<vmem>>, vector<16x384xf32>
    %c0_2 = arith.constant 0 : index
    %c0_3 = arith.constant 0 : index
    %4 = vector.load %arg3[%c0_2, %c0_3] : memref<16x32xbf16, #tpu.memory_space<vmem>>, vector<16x32xbf16>
    %c0_4 = arith.constant 0 : index
    %c0_5 = arith.constant 0 : index
    %5 = vector.load %arg4[%c0_4, %c0_5] : memref<32x384xbf16, #tpu.memory_space<vmem>>, vector<32x384xbf16>
    %cst = arith.constant dense<0.000000e+00> : vector<16x384xf32>
    %6 = tpu.matmul %4, %5, %cst {dimension_numbers = #tpu.dot_dimension_numbers<[1], [0], [0], [1], [0, 0, 1, 1], [], []>} : vector<16x32xbf16>, vector<32x384xbf16>, vector<16x384xf32> -> vector<16x384xf32>
    %7 = arith.addf %3, %6 : vector<16x384xf32>
    %c0_6 = arith.constant 0 : index
    %c0_7 = arith.constant 0 : index
    %8 = vector.load %arg7[%c0_6, %c0_7] : memref<16x384xf32, #tpu.memory_space<vmem>>, vector<16x384xf32>
    tpu.vector_store %arg7[%c0_6, %c0_7], %7 {strides = array<i32>} : memref<16x384xf32, #tpu.memory_space<vmem>>, vector<16x384xf32>,
    %c0_i32_8 = arith.constant 0 : i32
    %9 = arith.cmpi eq, %arg2, %c0_i32_8 : i32
    %10 = arith.extui %9 : i1 to i32
    %c0_i32_9 = arith.constant 0 : i32
    %11 = arith.cmpi ne, %10, %c0_i32_9 : i32
    scf.if %11 {
      %c0_10 = arith.constant 0 : index
      %c0_11 = arith.constant 0 : index
      %12 = vector.load %arg7[%c0_10, %c0_11] : memref<16x384xf32, #tpu.memory_space<vmem>>, vector<16x384xf32>
      %13 = arith.truncf %12 : vector<16x384xf32> to vector<16x384xbf16>
      %c0_12 = arith.constant 0 : index
      %c0_13 = arith.constant 0 : index
      %14 = vector.load %arg6[%c0_12, %c0_13] : memref<16x384xbf16, #tpu.memory_space<vmem>>, vector<16x384xbf16>
      tpu.vector_store %arg6[%c0_12, %c0_13], %13 {strides = array<i32>} : memref<16x384xbf16, #tpu.memory_space<vmem>>, vector<16x384xbf16>,
    } else {
    }
    return
  }
  func.func @transform_0(%arg0: i32, %arg1: i32, %arg2: i32) -> (i32, i32) {
    %c0_i32 = arith.constant 0 : i32
    return %arg0, %arg2 : i32, i32
  }
  func.func @transform_1(%arg0: i32, %arg1: i32, %arg2: i32) -> (i32, i32) {
    %c0_i32 = arith.constant 0 : i32
    return %arg2, %arg1 : i32, i32
  }
  func.func @transform_2(%arg0: i32, %arg1: i32, %arg2: i32) -> (i32, i32) {
    %c0_i32 = arith.constant 0 : i32
    %c0_i32_0 = arith.constant 0 : i32
    return %c0_i32, %arg1 : i32, i32
  }
  func.func @transform_3(%arg0: i32, %arg1: i32, %arg2: i32) -> (i32, i32) {
    %c0_i32 = arith.constant 0 : i32
    return %arg0, %arg1 : i32, i32
  }
}

module attributes {stable_mosaic.version = 11 : i64} {
  func.func @_flash_attn_kernel(%arg0: i32, %arg1: i32, %arg2: i32, %arg3: memref<1x4x8x32xbf16, #tpu.memory_space<vmem>>, %arg4: memref<1x4x8x32xbf16, #tpu.memory_space<vmem>>, %arg5: memref<1x4x8x32xbf16, #tpu.memory_space<vmem>>, %arg6: memref<1x8x128xbf16, #tpu.memory_space<vmem>>, %arg7: memref<4x8x1xf32, #tpu.memory_space<vmem>>, %arg8: memref<4x8x1xf32, #tpu.memory_space<vmem>>, %arg9: memref<4x8x32xf32, #tpu.memory_space<vmem>>) attributes {dimension_semantics = [#tpu.dimension_semantics<parallel>, #tpu.dimension_semantics<parallel>, #tpu.dimension_semantics<arbitrary>], iteration_bounds = array<i64: 2, 1, 1>, scalar_prefetch = 0 : i64, scratch_operands = 3 : i64, tpu.core_type = #tpu.core_type<tc>, window_params = [{transform_indices = @transform_0, window_bounds = array<i64: 1, 4, 8, 32>}, {transform_indices = @transform_1, window_bounds = array<i64: 1, 4, 8, 32>}, {transform_indices = @transform_2, window_bounds = array<i64: 1, 4, 8, 32>}, {transform_indices = @transform_3, window_bounds = array<i64: 1, 8, 128>}]} {
    %c0_i32 = arith.constant 0 : i32
    %0 = arith.cmpi eq, %arg2, %c0_i32 : i32
    %1 = arith.extui %0 : i1 to i32
    %c0_i32_0 = arith.constant 0 : i32
    %2 = arith.cmpi ne, %1, %c0_i32_0 : i32
    scf.if %2 {
      %cst_36 = arith.constant 0xFF800000 : f32
      %38 = vector.broadcast %cst_36 : f32 to vector<4x8x1xf32>
      %c0_37 = arith.constant 0 : index
      %c0_38 = arith.constant 0 : index
      %c0_39 = arith.constant 0 : index
      %39 = vector.load %arg7[%c0_37, %c0_38, %c0_39] : memref<4x8x1xf32, #tpu.memory_space<vmem>>, vector<4x8x1xf32>
      tpu.vector_store %arg7[%c0_37, %c0_38, %c0_39], %38 {strides = array<i32>} : memref<4x8x1xf32, #tpu.memory_space<vmem>>, vector<4x8x1xf32>,
      %cst_40 = arith.constant 0.000000e+00 : f32
      %40 = vector.broadcast %cst_40 : f32 to vector<4x8x1xf32>
      %c0_41 = arith.constant 0 : index
      %c0_42 = arith.constant 0 : index
      %c0_43 = arith.constant 0 : index
      %41 = vector.load %arg8[%c0_41, %c0_42, %c0_43] : memref<4x8x1xf32, #tpu.memory_space<vmem>>, vector<4x8x1xf32>
      tpu.vector_store %arg8[%c0_41, %c0_42, %c0_43], %40 {strides = array<i32>} : memref<4x8x1xf32, #tpu.memory_space<vmem>>, vector<4x8x1xf32>,
      %cst_44 = arith.constant 0.000000e+00 : f32
      %42 = vector.broadcast %cst_44 : f32 to vector<4x8x32xf32>
      %c0_45 = arith.constant 0 : index
      %c0_46 = arith.constant 0 : index
      %c0_47 = arith.constant 0 : index
      %43 = vector.load %arg9[%c0_45, %c0_46, %c0_47] : memref<4x8x32xf32, #tpu.memory_space<vmem>>, vector<4x8x32xf32>
      tpu.vector_store %arg9[%c0_45, %c0_46, %c0_47], %42 {strides = array<i32>} : memref<4x8x32xf32, #tpu.memory_space<vmem>>, vector<4x8x32xf32>,
    } else {
    }
    %c0 = arith.constant 0 : index
    %c0_1 = arith.constant 0 : index
    %c0_2 = arith.constant 0 : index
    %c0_3 = arith.constant 0 : index
    %3 = vector.load %arg3[%c0, %c0_1, %c0_2, %c0_3] : memref<1x4x8x32xbf16, #tpu.memory_space<vmem>>, vector<1x4x8x32xbf16>
    %4 = vector.shape_cast %3 : vector<1x4x8x32xbf16> to vector<4x8x32xbf16>
    %c0_4 = arith.constant 0 : index
    %c0_5 = arith.constant 0 : index
    %c0_6 = arith.constant 0 : index
    %c0_7 = arith.constant 0 : index
    %5 = vector.load %arg4[%c0_4, %c0_5, %c0_6, %c0_7] : memref<1x4x8x32xbf16, #tpu.memory_space<vmem>>, vector<1x4x8x32xbf16>
    %6 = vector.shape_cast %5 : vector<1x4x8x32xbf16> to vector<4x8x32xbf16>
    %c0_8 = arith.constant 0 : index
    %c0_9 = arith.constant 0 : index
    %c0_10 = arith.constant 0 : index
    %c0_11 = arith.constant 0 : index
    %7 = vector.load %arg5[%c0_8, %c0_9, %c0_10, %c0_11] : memref<1x4x8x32xbf16, #tpu.memory_space<vmem>>, vector<1x4x8x32xbf16>
    %8 = vector.shape_cast %7 : vector<1x4x8x32xbf16> to vector<4x8x32xbf16>
    "tpu.trace_start"() <{level = 10 : i32, message = "hqd,hkd->hqk"}> : () -> ()
    %cst = arith.constant dense<0.000000e+00> : vector<4x8x8xf32>
    %9 = tpu.matmul %4, %6, %cst {dimension_numbers = #tpu.dot_dimension_numbers<[2], [2], [1], [1], [0, 0, 0, 1, 1, 1], [0], [0]>} : vector<4x8x32xbf16>, vector<4x8x32xbf16>, vector<4x8x8xf32> -> vector<4x8x8xf32>
    "tpu.trace_stop"() : () -> ()
    %cst_12 = arith.constant 0.176776692 : f32
    %10 = vector.broadcast %cst_12 : f32 to vector<4x8x8xf32>
    %11 = arith.mulf %9, %10 : vector<4x8x8xf32>
    %c0_13 = arith.constant 0 : index
    %c0_14 = arith.constant 0 : index
    %c0_15 = arith.constant 0 : index
    %12 = vector.load %arg7[%c0_13, %c0_14, %c0_15] : memref<4x8x1xf32, #tpu.memory_space<vmem>>, vector<4x8x1xf32>
    %cst_16 = arith.constant dense<0xFF800000> : vector<4x8xf32>
    %13 = vector.multi_reduction <maximumf>, %11, %cst_16 [2] : vector<4x8x8xf32> to vector<4x8xf32>
    %14 = vector.shape_cast %13 : vector<4x8xf32> to vector<4x8x1xf32>
    %15 = arith.maximumf %12, %14 : vector<4x8x1xf32>
    %16 = arith.subf %12, %15 : vector<4x8x1xf32>
    %17 = math.exp %16 : vector<4x8x1xf32>
    %18 = vector.broadcast %15 : vector<4x8x1xf32> to vector<4x8x8xf32>
    %19 = arith.subf %11, %18 : vector<4x8x8xf32>
    %20 = math.exp %19 : vector<4x8x8xf32>
    %c0_17 = arith.constant 0 : index
    %c0_18 = arith.constant 0 : index
    %c0_19 = arith.constant 0 : index
    %21 = vector.load %arg8[%c0_17, %c0_18, %c0_19] : memref<4x8x1xf32, #tpu.memory_space<vmem>>, vector<4x8x1xf32>
    %22 = arith.mulf %17, %21 : vector<4x8x1xf32>
    %cst_20 = arith.constant dense<0.000000e+00> : vector<4x8xf32>
    %23 = vector.multi_reduction <add>, %20, %cst_20 [2] : vector<4x8x8xf32> to vector<4x8xf32>
    %24 = vector.shape_cast %23 : vector<4x8xf32> to vector<4x8x1xf32>
    %25 = arith.addf %22, %24 : vector<4x8x1xf32>
    %c0_21 = arith.constant 0 : index
    %c0_22 = arith.constant 0 : index
    %c0_23 = arith.constant 0 : index
    %26 = vector.load %arg8[%c0_21, %c0_22, %c0_23] : memref<4x8x1xf32, #tpu.memory_space<vmem>>, vector<4x8x1xf32>
    tpu.vector_store %arg8[%c0_21, %c0_22, %c0_23], %25 {strides = array<i32>} : memref<4x8x1xf32, #tpu.memory_space<vmem>>, vector<4x8x1xf32>,
    %c0_24 = arith.constant 0 : index
    %c0_25 = arith.constant 0 : index
    %c0_26 = arith.constant 0 : index
    %27 = vector.load %arg9[%c0_24, %c0_25, %c0_26] : memref<4x8x32xf32, #tpu.memory_space<vmem>>, vector<4x8x32xf32>
    %28 = vector.broadcast %17 : vector<4x8x1xf32> to vector<4x8x32xf32>
    %29 = arith.mulf %28, %27 : vector<4x8x32xf32>
    %30 = arith.truncf %20 : vector<4x8x8xf32> to vector<4x8x8xbf16>
    "tpu.trace_start"() <{level = 10 : i32, message = "hqk,hkd->hqd"}> : () -> ()
    %cst_27 = arith.constant dense<0.000000e+00> : vector<4x8x32xf32>
    %31 = tpu.matmul %30, %8, %cst_27 {dimension_numbers = #tpu.dot_dimension_numbers<[2], [1], [1], [2], [0, 0, 0, 1, 1, 2], [0], [0]>} : vector<4x8x8xbf16>, vector<4x8x32xbf16>, vector<4x8x32xf32> -> vector<4x8x32xf32>
    "tpu.trace_stop"() : () -> ()
    %32 = arith.addf %29, %31 : vector<4x8x32xf32>
    %c0_28 = arith.constant 0 : index
    %c0_29 = arith.constant 0 : index
    %c0_30 = arith.constant 0 : index
    %33 = vector.load %arg9[%c0_28, %c0_29, %c0_30] : memref<4x8x32xf32, #tpu.memory_space<vmem>>, vector<4x8x32xf32>
    tpu.vector_store %arg9[%c0_28, %c0_29, %c0_30], %32 {strides = array<i32>} : memref<4x8x32xf32, #tpu.memory_space<vmem>>, vector<4x8x32xf32>,
    %c0_31 = arith.constant 0 : index
    %c0_32 = arith.constant 0 : index
    %c0_33 = arith.constant 0 : index
    %34 = vector.load %arg7[%c0_31, %c0_32, %c0_33] : memref<4x8x1xf32, #tpu.memory_space<vmem>>, vector<4x8x1xf32>
    tpu.vector_store %arg7[%c0_31, %c0_32, %c0_33], %15 {strides = array<i32>} : memref<4x8x1xf32, #tpu.memory_space<vmem>>, vector<4x8x1xf32>,
    %c0_i32_34 = arith.constant 0 : i32
    %35 = arith.cmpi eq, %arg2, %c0_i32_34 : i32
    %36 = arith.extui %35 : i1 to i32
    %c0_i32_35 = arith.constant 0 : i32
    %37 = arith.cmpi ne, %36, %c0_i32_35 : i32
    scf.if %37 {
      %c0_36 = arith.constant 0 : index
      %c0_37 = arith.constant 0 : index
      %c0_38 = arith.constant 0 : index
      %38 = vector.load %arg9[%c0_36, %c0_37, %c0_38] : memref<4x8x32xf32, #tpu.memory_space<vmem>>, vector<4x8x32xf32>
      %c0_39 = arith.constant 0 : index
      %c0_40 = arith.constant 0 : index
      %c0_41 = arith.constant 0 : index
      %39 = vector.load %arg8[%c0_39, %c0_40, %c0_41] : memref<4x8x1xf32, #tpu.memory_space<vmem>>, vector<4x8x1xf32>
      %40 = vector.broadcast %39 : vector<4x8x1xf32> to vector<4x8x32xf32>
      %41 = arith.divf %38, %40 : vector<4x8x32xf32>
      %42 = vector.extract_strided_slice %41 {offsets = [0, 0, 0], sizes = [1, 8, 32], strides = [1, 1, 1]} : vector<4x8x32xf32> to vector<1x8x32xf32>
      %43 = vector.shape_cast %42 : vector<1x8x32xf32> to vector<8x32xf32>
      %44 = vector.extract_strided_slice %41 {offsets = [1, 0, 0], sizes = [1, 8, 32], strides = [1, 1, 1]} : vector<4x8x32xf32> to vector<1x8x32xf32>
      %45 = vector.shape_cast %44 : vector<1x8x32xf32> to vector<8x32xf32>
      %46 = vector.extract_strided_slice %41 {offsets = [2, 0, 0], sizes = [1, 8, 32], strides = [1, 1, 1]} : vector<4x8x32xf32> to vector<1x8x32xf32>
      %47 = vector.shape_cast %46 : vector<1x8x32xf32> to vector<8x32xf32>
      %48 = vector.extract_strided_slice %41 {offsets = [3, 0, 0], sizes = [1, 8, 32], strides = [1, 1, 1]} : vector<4x8x32xf32> to vector<1x8x32xf32>
      %49 = vector.shape_cast %48 : vector<1x8x32xf32> to vector<8x32xf32>
      %50 = tpu.concatenate %43, %45, %47, %49 in 1 : vector<8x32xf32>, vector<8x32xf32>, vector<8x32xf32>, vector<8x32xf32> -> vector<8x128xf32>
      %51 = arith.truncf %50 : vector<8x128xf32> to vector<8x128xbf16>
      %c0_42 = arith.constant 0 : index
      %c0_43 = arith.constant 0 : index
      %c0_44 = arith.constant 0 : index
      %52 = vector.load %arg6[%c0_42, %c0_43, %c0_44] : memref<1x8x128xbf16, #tpu.memory_space<vmem>>, vector<1x8x128xbf16>
      %53 = vector.shape_cast %52 : vector<1x8x128xbf16> to vector<8x128xbf16>
      %54 = vector.shape_cast %51 : vector<8x128xbf16> to vector<1x8x128xbf16>
      tpu.vector_store %arg6[%c0_42, %c0_43, %c0_44], %54 {strides = array<i32>} : memref<1x8x128xbf16, #tpu.memory_space<vmem>>, vector<1x8x128xbf16>,
    } else {
    }
    return
  }
  func.func @transform_0(%arg0: i32, %arg1: i32, %arg2: i32) -> (i32, i32, i32, i32) {
    %c0_i32 = arith.constant 0 : i32
    %c0_i32_0 = arith.constant 0 : i32
    %c0_i32_1 = arith.constant 0 : i32
    return %arg0, %c0_i32, %arg1, %c0_i32_0 : i32, i32, i32, i32
  }
  func.func @transform_1(%arg0: i32, %arg1: i32, %arg2: i32) -> (i32, i32, i32, i32) {
    %c0_i32 = arith.constant 0 : i32
    %c0_i32_0 = arith.constant 0 : i32
    %c0_i32_1 = arith.constant 0 : i32
    return %arg0, %c0_i32, %arg2, %c0_i32_0 : i32, i32, i32, i32
  }
  func.func @transform_2(%arg0: i32, %arg1: i32, %arg2: i32) -> (i32, i32, i32, i32) {
    %c0_i32 = arith.constant 0 : i32
    %c0_i32_0 = arith.constant 0 : i32
    %c0_i32_1 = arith.constant 0 : i32
    return %arg0, %c0_i32, %arg2, %c0_i32_0 : i32, i32, i32, i32
  }
  func.func @transform_3(%arg0: i32, %arg1: i32, %arg2: i32) -> (i32, i32, i32) {
    %c0_i32 = arith.constant 0 : i32
    %c0_i32_0 = arith.constant 0 : i32
    return %arg0, %arg1, %c0_i32 : i32, i32, i32
  }
}

module attributes {stable_mosaic.version = 11 : i64} {
  func.func @_linear_res_ln_kernel(%arg0: i32, %arg1: i32, %arg2: memref<16x128xbf16, #tpu.memory_space<vmem>>, %arg3: memref<128x32xbf16, #tpu.memory_space<vmem>>, %arg4: memref<1x32xf32, #tpu.memory_space<vmem>>, %arg5: memref<16x32xbf16, #tpu.memory_space<vmem>>, %arg6: memref<1x32xf32, #tpu.memory_space<vmem>>, %arg7: memref<1x32xf32, #tpu.memory_space<vmem>>, %arg8: memref<16x32xbf16, #tpu.memory_space<vmem>>, %arg9: memref<16x32xf32, #tpu.memory_space<vmem>>) attributes {dimension_semantics = [#tpu.dimension_semantics<parallel>, #tpu.dimension_semantics<arbitrary>], iteration_bounds = array<i64: 1, 1>, scalar_prefetch = 0 : i64, scratch_operands = 1 : i64, tpu.core_type = #tpu.core_type<tc>, window_params = [{transform_indices = @transform_0, window_bounds = array<i64: 16, 128>}, {transform_indices = @transform_1, window_bounds = array<i64: 128, 32>}, {pipeline_mode = #tpu.pipeline_mode<synchronous>, transform_indices = @transform_2, window_bounds = array<i64: 1, 32>}, {transform_indices = @transform_3, window_bounds = array<i64: 16, 32>}, {pipeline_mode = #tpu.pipeline_mode<synchronous>, transform_indices = @transform_4, window_bounds = array<i64: 1, 32>}, {pipeline_mode = #tpu.pipeline_mode<synchronous>, transform_indices = @transform_5, window_bounds = array<i64: 1, 32>}, {transform_indices = @transform_6, window_bounds = array<i64: 16, 32>}]} {
    %c0_i32 = arith.constant 0 : i32
    %0 = arith.cmpi eq, %arg1, %c0_i32 : i32
    %1 = arith.extui %0 : i1 to i32
    %c0_i32_0 = arith.constant 0 : i32
    %2 = arith.cmpi ne, %1, %c0_i32_0 : i32
    scf.if %2 {
      %c0_10 = arith.constant 0 : index
      %c0_11 = arith.constant 0 : index
      %12 = vector.load %arg5[%c0_10, %c0_11] : memref<16x32xbf16, #tpu.memory_space<vmem>>, vector<16x32xbf16>
      %13 = arith.extf %12 : vector<16x32xbf16> to vector<16x32xf32>
      %c0_12 = arith.constant 0 : index
      %c0_13 = arith.constant 0 : index
      %14 = vector.load %arg4[%c0_12, %c0_13] : memref<1x32xf32, #tpu.memory_space<vmem>>, vector<1x32xf32>
      %15 = vector.broadcast %14 : vector<1x32xf32> to vector<16x32xf32>
      %16 = arith.addf %13, %15 : vector<16x32xf32>
      %c0_14 = arith.constant 0 : index
      %c0_15 = arith.constant 0 : index
      %17 = vector.load %arg9[%c0_14, %c0_15] : memref<16x32xf32, #tpu.memory_space<vmem>>, vector<16x32xf32>
      tpu.vector_store %arg9[%c0_14, %c0_15], %16 {strides = array<i32>} : memref<16x32xf32, #tpu.memory_space<vmem>>, vector<16x32xf32>,
    } else {
    }
    %c0 = arith.constant 0 : index
    %c0_1 = arith.constant 0 : index
    %3 = vector.load %arg9[%c0, %c0_1] : memref<16x32xf32, #tpu.memory_space<vmem>>, vector<16x32xf32>
    %c0_2 = arith.constant 0 : index
    %c0_3 = arith.constant 0 : index
    %4 = vector.load %arg2[%c0_2, %c0_3] : memref<16x128xbf16, #tpu.memory_space<vmem>>, vector<16x128xbf16>
    %c0_4 = arith.constant 0 : index
    %c0_5 = arith.constant 0 : index
    %5 = vector.load %arg3[%c0_4, %c0_5] : memref<128x32xbf16, #tpu.memory_space<vmem>>, vector<128x32xbf16>
    %cst = arith.constant dense<0.000000e+00> : vector<16x32xf32>
    %6 = tpu.matmul %4, %5, %cst {dimension_numbers = #tpu.dot_dimension_numbers<[1], [0], [0], [1], [0, 0, 1, 1], [], []>} : vector<16x128xbf16>, vector<128x32xbf16>, vector<16x32xf32> -> vector<16x32xf32>
    %7 = arith.addf %3, %6 : vector<16x32xf32>
    %c0_6 = arith.constant 0 : index
    %c0_7 = arith.constant 0 : index
    %8 = vector.load %arg9[%c0_6, %c0_7] : memref<16x32xf32, #tpu.memory_space<vmem>>, vector<16x32xf32>
    tpu.vector_store %arg9[%c0_6, %c0_7], %7 {strides = array<i32>} : memref<16x32xf32, #tpu.memory_space<vmem>>, vector<16x32xf32>,
    %c0_i32_8 = arith.constant 0 : i32
    %9 = arith.cmpi eq, %arg1, %c0_i32_8 : i32
    %10 = arith.extui %9 : i1 to i32
    %c0_i32_9 = arith.constant 0 : i32
    %11 = arith.cmpi ne, %10, %c0_i32_9 : i32
    scf.if %11 {
      %c0_10 = arith.constant 0 : index
      %c0_11 = arith.constant 0 : index
      %12 = vector.load %arg9[%c0_10, %c0_11] : memref<16x32xf32, #tpu.memory_space<vmem>>, vector<16x32xf32>
      %cst_12 = arith.constant dense<0.000000e+00> : vector<16xf32>
      %13 = vector.multi_reduction <add>, %12, %cst_12 [1] : vector<16x32xf32> to vector<16xf32>
      %14 = vector.shape_cast %13 : vector<16xf32> to vector<16x1xf32>
      %cst_13 = arith.constant 3.200000e+01 : f32
      %15 = vector.broadcast %cst_13 : f32 to vector<16x1xf32>
      %16 = arith.divf %14, %15 : vector<16x1xf32>
      %17 = vector.broadcast %16 : vector<16x1xf32> to vector<16x32xf32>
      %18 = arith.subf %12, %17 : vector<16x32xf32>
      %19 = vector.broadcast %16 : vector<16x1xf32> to vector<16x32xf32>
      %20 = arith.subf %12, %19 : vector<16x32xf32>
      %21 = arith.mulf %18, %20 : vector<16x32xf32>
      %cst_14 = arith.constant dense<0.000000e+00> : vector<16xf32>
      %22 = vector.multi_reduction <add>, %21, %cst_14 [1] : vector<16x32xf32> to vector<16xf32>
      %23 = vector.shape_cast %22 : vector<16xf32> to vector<16x1xf32>
      %cst_15 = arith.constant 3.200000e+01 : f32
      %24 = vector.broadcast %cst_15 : f32 to vector<16x1xf32>
      %25 = arith.divf %23, %24 : vector<16x1xf32>
      %26 = vector.broadcast %16 : vector<16x1xf32> to vector<16x32xf32>
      %27 = arith.subf %12, %26 : vector<16x32xf32>
      %cst_16 = arith.constant 9.99999974E-6 : f32
      %28 = vector.broadcast %cst_16 : f32 to vector<16x1xf32>
      %29 = arith.addf %25, %28 : vector<16x1xf32>
      %30 = math.rsqrt %29 : vector<16x1xf32>
      %31 = vector.broadcast %30 : vector<16x1xf32> to vector<16x32xf32>
      %32 = arith.mulf %27, %31 : vector<16x32xf32>
      %c0_17 = arith.constant 0 : index
      %c0_18 = arith.constant 0 : index
      %33 = vector.load %arg6[%c0_17, %c0_18] : memref<1x32xf32, #tpu.memory_space<vmem>>, vector<1x32xf32>
      %34 = vector.broadcast %33 : vector<1x32xf32> to vector<16x32xf32>
      %35 = arith.mulf %32, %34 : vector<16x32xf32>
      %c0_19 = arith.constant 0 : index
      %c0_20 = arith.constant 0 : index
      %36 = vector.load %arg7[%c0_19, %c0_20] : memref<1x32xf32, #tpu.memory_space<vmem>>, vector<1x32xf32>
      %37 = vector.broadcast %36 : vector<1x32xf32> to vector<16x32xf32>
      %38 = arith.addf %35, %37 : vector<16x32xf32>
      %39 = arith.truncf %38 : vector<16x32xf32> to vector<16x32xbf16>
      %c0_21 = arith.constant 0 : index
      %c0_22 = arith.constant 0 : index
      %40 = vector.load %arg8[%c0_21, %c0_22] : memref<16x32xbf16, #tpu.memory_space<vmem>>, vector<16x32xbf16>
      tpu.vector_store %arg8[%c0_21, %c0_22], %39 {strides = array<i32>} : memref<16x32xbf16, #tpu.memory_space<vmem>>, vector<16x32xbf16>,
    } else {
    }
    return
  }
  func.func @transform_0(%arg0: i32, %arg1: i32) -> (i32, i32) {
    %c0_i32 = arith.constant 0 : i32
    return %arg0, %arg1 : i32, i32
  }
  func.func @transform_1(%arg0: i32, %arg1: i32) -> (i32, i32) {
    %c0_i32 = arith.constant 0 : i32
    %c0_i32_0 = arith.constant 0 : i32
    return %arg1, %c0_i32 : i32, i32
  }
  func.func @transform_2(%arg0: i32, %arg1: i32) -> (i32, i32) {
    %c0_i32 = arith.constant 0 : i32
    %c0_i32_0 = arith.constant 0 : i32
    %c0_i32_1 = arith.constant 0 : i32
    return %c0_i32, %c0_i32_0 : i32, i32
  }
  func.func @transform_3(%arg0: i32, %arg1: i32) -> (i32, i32) {
    %c0_i32 = arith.constant 0 : i32
    %c0_i32_0 = arith.constant 0 : i32
    return %arg0, %c0_i32 : i32, i32
  }
  func.func @transform_4(%arg0: i32, %arg1: i32) -> (i32, i32) {
    %c0_i32 = arith.constant 0 : i32
    %c0_i32_0 = arith.constant 0 : i32
    %c0_i32_1 = arith.constant 0 : i32
    return %c0_i32, %c0_i32_0 : i32, i32
  }
  func.func @transform_5(%arg0: i32, %arg1: i32) -> (i32, i32) {
    %c0_i32 = arith.constant 0 : i32
    %c0_i32_0 = arith.constant 0 : i32
    %c0_i32_1 = arith.constant 0 : i32
    return %c0_i32, %c0_i32_0 : i32, i32
  }
  func.func @transform_6(%arg0: i32, %arg1: i32) -> (i32, i32) {
    %c0_i32 = arith.constant 0 : i32
    %c0_i32_0 = arith.constant 0 : i32
    return %arg0, %c0_i32 : i32, i32
  }
}

module attributes {stable_mosaic.version = 11 : i64} {
  func.func @_ffn_res_ln_kernel(%arg0: i32, %arg1: i32, %arg2: memref<16x32xbf16, #tpu.memory_space<vmem>>, %arg3: memref<32x64xbf16, #tpu.memory_space<vmem>>, %arg4: memref<1x64xf32, #tpu.memory_space<vmem>>, %arg5: memref<64x32xbf16, #tpu.memory_space<vmem>>, %arg6: memref<1x32xf32, #tpu.memory_space<vmem>>, %arg7: memref<1x32xf32, #tpu.memory_space<vmem>>, %arg8: memref<1x32xf32, #tpu.memory_space<vmem>>, %arg9: memref<16x32xbf16, #tpu.memory_space<vmem>>, %arg10: memref<16x32xf32, #tpu.memory_space<vmem>>) attributes {dimension_semantics = [#tpu.dimension_semantics<parallel>, #tpu.dimension_semantics<arbitrary>], iteration_bounds = array<i64: 1, 1>, scalar_prefetch = 0 : i64, scratch_operands = 1 : i64, tpu.core_type = #tpu.core_type<tc>, window_params = [{transform_indices = @transform_0, window_bounds = array<i64: 16, 32>}, {transform_indices = @transform_1, window_bounds = array<i64: 32, 64>}, {transform_indices = @transform_2, window_bounds = array<i64: 1, 64>}, {transform_indices = @transform_3, window_bounds = array<i64: 64, 32>}, {pipeline_mode = #tpu.pipeline_mode<synchronous>, transform_indices = @transform_4, window_bounds = array<i64: 1, 32>}, {pipeline_mode = #tpu.pipeline_mode<synchronous>, transform_indices = @transform_5, window_bounds = array<i64: 1, 32>}, {pipeline_mode = #tpu.pipeline_mode<synchronous>, transform_indices = @transform_6, window_bounds = array<i64: 1, 32>}, {transform_indices = @transform_7, window_bounds = array<i64: 16, 32>}]} {
    %c0_i32 = arith.constant 0 : i32
    %0 = arith.cmpi eq, %arg1, %c0_i32 : i32
    %1 = arith.extui %0 : i1 to i32
    %c0_i32_0 = arith.constant 0 : i32
    %2 = arith.cmpi ne, %1, %c0_i32_0 : i32
    scf.if %2 {
      %c0_16 = arith.constant 0 : index
      %c0_17 = arith.constant 0 : index
      %20 = vector.load %arg2[%c0_16, %c0_17] : memref<16x32xbf16, #tpu.memory_space<vmem>>, vector<16x32xbf16>
      %21 = arith.extf %20 : vector<16x32xbf16> to vector<16x32xf32>
      %c0_18 = arith.constant 0 : index
      %c0_19 = arith.constant 0 : index
      %22 = vector.load %arg6[%c0_18, %c0_19] : memref<1x32xf32, #tpu.memory_space<vmem>>, vector<1x32xf32>
      %23 = vector.broadcast %22 : vector<1x32xf32> to vector<16x32xf32>
      %24 = arith.addf %21, %23 : vector<16x32xf32>
      %c0_20 = arith.constant 0 : index
      %c0_21 = arith.constant 0 : index
      %25 = vector.load %arg10[%c0_20, %c0_21] : memref<16x32xf32, #tpu.memory_space<vmem>>, vector<16x32xf32>
      tpu.vector_store %arg10[%c0_20, %c0_21], %24 {strides = array<i32>} : memref<16x32xf32, #tpu.memory_space<vmem>>, vector<16x32xf32>,
    } else {
    }
    %c0 = arith.constant 0 : index
    %c0_1 = arith.constant 0 : index
    %3 = vector.load %arg2[%c0, %c0_1] : memref<16x32xbf16, #tpu.memory_space<vmem>>, vector<16x32xbf16>
    %c0_2 = arith.constant 0 : index
    %c0_3 = arith.constant 0 : index
    %4 = vector.load %arg3[%c0_2, %c0_3] : memref<32x64xbf16, #tpu.memory_space<vmem>>, vector<32x64xbf16>
    %cst = arith.constant dense<0.000000e+00> : vector<16x64xf32>
    %5 = tpu.matmul %3, %4, %cst {dimension_numbers = #tpu.dot_dimension_numbers<[1], [0], [0], [1], [0, 0, 1, 1], [], []>} : vector<16x32xbf16>, vector<32x64xbf16>, vector<16x64xf32> -> vector<16x64xf32>
    %c0_4 = arith.constant 0 : index
    %c0_5 = arith.constant 0 : index
    %6 = vector.load %arg4[%c0_4, %c0_5] : memref<1x64xf32, #tpu.memory_space<vmem>>, vector<1x64xf32>
    %7 = vector.broadcast %6 : vector<1x64xf32> to vector<16x64xf32>
    %8 = arith.addf %5, %7 : vector<16x64xf32>
    %cst_6 = arith.constant 0.000000e+00 : f32
    %9 = vector.broadcast %cst_6 : f32 to vector<16x64xf32>
    %10 = arith.maximumf %8, %9 : vector<16x64xf32>
    %c0_7 = arith.constant 0 : index
    %c0_8 = arith.constant 0 : index
    %11 = vector.load %arg10[%c0_7, %c0_8] : memref<16x32xf32, #tpu.memory_space<vmem>>, vector<16x32xf32>
    %12 = arith.truncf %10 : vector<16x64xf32> to vector<16x64xbf16>
    %c0_9 = arith.constant 0 : index
    %c0_10 = arith.constant 0 : index
    %13 = vector.load %arg5[%c0_9, %c0_10] : memref<64x32xbf16, #tpu.memory_space<vmem>>, vector<64x32xbf16>
    %cst_11 = arith.constant dense<0.000000e+00> : vector<16x32xf32>
    %14 = tpu.matmul %12, %13, %cst_11 {dimension_numbers = #tpu.dot_dimension_numbers<[1], [0], [0], [1], [0, 0, 1, 1], [], []>} : vector<16x64xbf16>, vector<64x32xbf16>, vector<16x32xf32> -> vector<16x32xf32>
    %15 = arith.addf %11, %14 : vector<16x32xf32>
    %c0_12 = arith.constant 0 : index
    %c0_13 = arith.constant 0 : index
    %16 = vector.load %arg10[%c0_12, %c0_13] : memref<16x32xf32, #tpu.memory_space<vmem>>, vector<16x32xf32>
    tpu.vector_store %arg10[%c0_12, %c0_13], %15 {strides = array<i32>} : memref<16x32xf32, #tpu.memory_space<vmem>>, vector<16x32xf32>,
    %c0_i32_14 = arith.constant 0 : i32
    %17 = arith.cmpi eq, %arg1, %c0_i32_14 : i32
    %18 = arith.extui %17 : i1 to i32
    %c0_i32_15 = arith.constant 0 : i32
    %19 = arith.cmpi ne, %18, %c0_i32_15 : i32
    scf.if %19 {
      %c0_16 = arith.constant 0 : index
      %c0_17 = arith.constant 0 : index
      %20 = vector.load %arg10[%c0_16, %c0_17] : memref<16x32xf32, #tpu.memory_space<vmem>>, vector<16x32xf32>
      %cst_18 = arith.constant dense<0.000000e+00> : vector<16xf32>
      %21 = vector.multi_reduction <add>, %20, %cst_18 [1] : vector<16x32xf32> to vector<16xf32>
      %22 = vector.shape_cast %21 : vector<16xf32> to vector<16x1xf32>
      %cst_19 = arith.constant 3.200000e+01 : f32
      %23 = vector.broadcast %cst_19 : f32 to vector<16x1xf32>
      %24 = arith.divf %22, %23 : vector<16x1xf32>
      %25 = vector.broadcast %24 : vector<16x1xf32> to vector<16x32xf32>
      %26 = arith.subf %20, %25 : vector<16x32xf32>
      %27 = vector.broadcast %24 : vector<16x1xf32> to vector<16x32xf32>
      %28 = arith.subf %20, %27 : vector<16x32xf32>
      %29 = arith.mulf %26, %28 : vector<16x32xf32>
      %cst_20 = arith.constant dense<0.000000e+00> : vector<16xf32>
      %30 = vector.multi_reduction <add>, %29, %cst_20 [1] : vector<16x32xf32> to vector<16xf32>
      %31 = vector.shape_cast %30 : vector<16xf32> to vector<16x1xf32>
      %cst_21 = arith.constant 3.200000e+01 : f32
      %32 = vector.broadcast %cst_21 : f32 to vector<16x1xf32>
      %33 = arith.divf %31, %32 : vector<16x1xf32>
      %34 = vector.broadcast %24 : vector<16x1xf32> to vector<16x32xf32>
      %35 = arith.subf %20, %34 : vector<16x32xf32>
      %cst_22 = arith.constant 9.99999974E-6 : f32
      %36 = vector.broadcast %cst_22 : f32 to vector<16x1xf32>
      %37 = arith.addf %33, %36 : vector<16x1xf32>
      %38 = math.rsqrt %37 : vector<16x1xf32>
      %39 = vector.broadcast %38 : vector<16x1xf32> to vector<16x32xf32>
      %40 = arith.mulf %35, %39 : vector<16x32xf32>
      %c0_23 = arith.constant 0 : index
      %c0_24 = arith.constant 0 : index
      %41 = vector.load %arg7[%c0_23, %c0_24] : memref<1x32xf32, #tpu.memory_space<vmem>>, vector<1x32xf32>
      %42 = vector.broadcast %41 : vector<1x32xf32> to vector<16x32xf32>
      %43 = arith.mulf %40, %42 : vector<16x32xf32>
      %c0_25 = arith.constant 0 : index
      %c0_26 = arith.constant 0 : index
      %44 = vector.load %arg8[%c0_25, %c0_26] : memref<1x32xf32, #tpu.memory_space<vmem>>, vector<1x32xf32>
      %45 = vector.broadcast %44 : vector<1x32xf32> to vector<16x32xf32>
      %46 = arith.addf %43, %45 : vector<16x32xf32>
      %47 = arith.truncf %46 : vector<16x32xf32> to vector<16x32xbf16>
      %c0_27 = arith.constant 0 : index
      %c0_28 = arith.constant 0 : index
      %48 = vector.load %arg9[%c0_27, %c0_28] : memref<16x32xbf16, #tpu.memory_space<vmem>>, vector<16x32xbf16>
      tpu.vector_store %arg9[%c0_27, %c0_28], %47 {strides = array<i32>} : memref<16x32xbf16, #tpu.memory_space<vmem>>, vector<16x32xbf16>,
    } else {
    }
    return
  }
  func.func @transform_0(%arg0: i32, %arg1: i32) -> (i32, i32) {
    %c0_i32 = arith.constant 0 : i32
    %c0_i32_0 = arith.constant 0 : i32
    return %arg0, %c0_i32 : i32, i32
  }
  func.func @transform_1(%arg0: i32, %arg1: i32) -> (i32, i32) {
    %c0_i32 = arith.constant 0 : i32
    %c0_i32_0 = arith.constant 0 : i32
    return %c0_i32, %arg1 : i32, i32
  }
  func.func @transform_2(%arg0: i32, %arg1: i32) -> (i32, i32) {
    %c0_i32 = arith.constant 0 : i32
    %c0_i32_0 = arith.constant 0 : i32
    return %c0_i32, %arg1 : i32, i32
  }
  func.func @transform_3(%arg0: i32, %arg1: i32) -> (i32, i32) {
    %c0_i32 = arith.constant 0 : i32
    %c0_i32_0 = arith.constant 0 : i32
    return %arg1, %c0_i32 : i32, i32
  }
  func.func @transform_4(%arg0: i32, %arg1: i32) -> (i32, i32) {
    %c0_i32 = arith.constant 0 : i32
    %c0_i32_0 = arith.constant 0 : i32
    %c0_i32_1 = arith.constant 0 : i32
    return %c0_i32, %c0_i32_0 : i32, i32
  }
  func.func @transform_5(%arg0: i32, %arg1: i32) -> (i32, i32) {
    %c0_i32 = arith.constant 0 : i32
    %c0_i32_0 = arith.constant 0 : i32
    %c0_i32_1 = arith.constant 0 : i32
    return %c0_i32, %c0_i32_0 : i32, i32
  }
  func.func @transform_6(%arg0: i32, %arg1: i32) -> (i32, i32) {
    %c0_i32 = arith.constant 0 : i32
    %c0_i32_0 = arith.constant 0 : i32
    %c0_i32_1 = arith.constant 0 : i32
    return %c0_i32, %c0_i32_0 : i32, i32
  }
  func.func @transform_7(%arg0: i32, %arg1: i32) -> (i32, i32) {
    %c0_i32 = arith.constant 0 : i32
    %c0_i32_0 = arith.constant 0 : i32
    return %arg0, %c0_i32 : i32, i32
  }
}

</mosaic_0001>

<llo_original>
// kernel: transformer_encoder.8
$region0: #{transformer_encoder.8}
  #allocation0 [shape = 'u32[]', space=smem, size = 0x4, offset = 0x4, fixed_abs, tag = 'smem constant byte address 0x4 - core index']
  #allocation1 [shape = 'u32[144,128]{1,0:T(1,128)}', space=vmem, size = 0x12000, scoped, tag = 'internal scratch']
  #allocation2 [shape = 'f32[16,384]{1,0:T(8,128)}', space=vmem, size = 0x6000, scoped, tag = 'scratch operand']
  %s0 = inlined_call_operand.hbm [shape: bf16[16,32], index: 0, kind: input, shape index: {}]
  %s1 = inlined_call_operand.hbm [shape: bf16[32,384], index: 1, kind: input, shape index: {}]
  %s2 = inlined_call_operand.hbm [shape: f32[1,384], index: 2, kind: input, shape index: {}]
  %s3 = inlined_call_operand.hbm [shape: bf16[16,384], index: 3, kind: output, shape index: {}]
  %s4 = sld [smem:[#allocation0]]
  $region42: #{transformer_encoder.8} parent=0
    _
  %s6 = ssub.s32 1, %s4
  %s7 = scalar_select 0, %s6, %s4
  $region1: #{transformer_encoder.8} parent=0
    #allocation3 [shape = 'u8[4096]{0}', space=vmem, size = 0x1000, scoped, tag = 'input window, operand 0, single buffered']
    #allocation4 [shape = 's32[1]{0}', space=sflag, size = 0x4, scoped, tag = 'scoped memory for transformer_encoder.8']
    #allocation5 [shape = 's32[1]{0}', space=sflag, size = 0x4, scoped, tag = 'scoped memory for transformer_encoder.8']
    #allocation6 [shape = 'u8[24576]{0}', space=vmem, size = 0x6000, scoped, tag = 'input window, operand 1, single buffered']
    #allocation7 [shape = 's32[1]{0}', space=sflag, size = 0x4, scoped, tag = 'scoped memory for transformer_encoder.8']
    #allocation8 [shape = 'u8[1536]{0}', space=vmem, size = 0x800, scoped, tag = 'input window, operand 2, single buffered']
    #allocation9 [shape = 'u8[12288]{0}', space=vmem, size = 0x3000, scoped, tag = 'output window, operand 0, single buffered']
    %8 = vsyncpa [#allocation4], 0
    %9 = vsyncpa [#allocation7], 0
    %10 = vsyncpa [#allocation5], 0
    // Predicated region
    $region2: #{transformer_encoder.8} parent=1 // pred_check
      _
    $region3: #{transformer_encoder.8} parent=1 // pred_check_branch
      %12 = sbr.rel (0) target = $region5
    $region4: #{transformer_encoder.8} parent=1 // pred_region
      %s14 = ssub.s32 128, 128
      %15 = vsyncadd [#allocation4], %s14
      %s16 = sshll.u32 [#allocation3], 4
      %s17 = int_to_ptr.vmem [resolvable:$true] %s16
      %22 = dma.hbm_to_vmem [thread:$0]  %s0, 128, %s17, [#allocation4], 64, 64, 4
    $region5: #{transformer_encoder.8} parent=1 // pred_fallthru
      _
    // Predicated region
    $region6: #{transformer_encoder.8} parent=1 // pred_check
      _
    $region7: #{transformer_encoder.8} parent=1 // pred_check_branch
      %24 = sbr.rel (0) target = $region9
    $region8: #{transformer_encoder.8} parent=1 // pred_region
      %s26 = ssub.s32 768, 768
      %27 = vsyncadd [#allocation7], %s26
      %s28 = sshll.u32 [#allocation6], 4
      %s29 = int_to_ptr.vmem [resolvable:$true] %s28
      %34 = dma.hbm_to_vmem [thread:$0]  %s1, 768, %s29, [#allocation7], 192, 192, 12
    $region9: #{transformer_encoder.8} parent=1 // pred_fallthru
      _
    // Predicated region
    $region10: #{transformer_encoder.8} parent=1 // pred_check
      _
    $region11: #{transformer_encoder.8} parent=1 // pred_check_branch
      %36 = sbr.rel (0) target = $region13
    $region12: #{transformer_encoder.8} parent=1 // pred_region
      %s38 = ssub.s32 48, 48
      %39 = vsyncadd [#allocation7], %s38
      %s41 = sshll.u32 [#allocation8], 4
      %s42 = int_to_ptr.vmem [resolvable:$true] %s41
      %44 = dma.hbm_to_vmem [thread:$0]  %s2, 48, %s42, [#allocation7]
    $region13: #{transformer_encoder.8} parent=1 // pred_fallthru
      _
    // Predicated region
    $region14: #{transformer_encoder.8} parent=1 // pred_check
      _
    $region15: #{transformer_encoder.8} parent=1 // pred_check_branch
      %46 = sbr.rel (0) target = $region17
    $region16: #{transformer_encoder.8} parent=1 // pred_region
      %47 = dma.done [#allocation4], 128
    $region17: #{transformer_encoder.8} parent=1 // pred_fallthru
      _
    // Predicated region
    $region18: #{transformer_encoder.8} parent=1 // pred_check
      _
    $region19: #{transformer_encoder.8} parent=1 // pred_check_branch
      %49 = sbr.rel (0) target = $region21
    $region20: #{transformer_encoder.8} parent=1 // pred_region
      %50 = dma.done [#allocation7], 768
    $region21: #{transformer_encoder.8} parent=1 // pred_fallthru
      _
    // Predicated region
    $region22: #{transformer_encoder.8} parent=1 // pred_check
      _
    $region23: #{transformer_encoder.8} parent=1 // pred_check_branch
      %52 = sbr.rel (0) target = $region25
    $region24: #{transformer_encoder.8} parent=1 // pred_region
      %53 = dma.done [#allocation7], 48
    $region25: #{transformer_encoder.8} parent=1 // pred_fallthru
      _
    %p55 = scmp.eq.s32.totalorder 0, 0
    // Predicated region
    $region26: #{transformer_encoder.8} parent=1 // pred_check
      %p56 = pneg %p55
    $region27: #{transformer_encoder.8} parent=1 // pred_check_branch
      %58 = sbr.rel (%p56) target = $region29
    $region28: #{transformer_encoder.8} parent=1 // pred_region
      %v59 = vld [vmem:[#allocation8] sm:$0x7]
      %v61 = vlaneseq
      %v62 = vshrl.u32 %v61, 7
      %v63 = vsub.s32 0, %v62
      %v64 = vrot.slane %v59, %v63
      %v65 = vlaneseq
      %v66 = vshrl.u32 %v65, 7
      %v67 = vsub.s32 1, %v66
      %v68 = vrot.slane %v59, %v67
      %v69 = vlaneseq
      %v70 = vshrl.u32 %v69, 7
      %v71 = vsub.s32 2, %v70
      %v72 = vrot.slane %v59, %v71
      %76 = vst [vmem:[#allocation2] sm:$0xff] %v64
      %77 = vst [vmem:[#allocation2 + $0x8] sm:$0xff] %v68
      %78 = vst [vmem:[#allocation2 + $0x10] sm:$0xff] %v72
      %79 = vst [vmem:[#allocation2 + $0x18] sm:$0xff] %v64
      %80 = vst [vmem:[#allocation2 + $0x20] sm:$0xff] %v68
      %81 = vst [vmem:[#allocation2 + $0x28] sm:$0xff] %v72
    $region29: #{transformer_encoder.8} parent=1 // pred_fallthru
      _
    %v82 = vld [vmem:[#allocation2] sm:$0xff]
    %v83 = vld [vmem:[#allocation2 + $0x8] sm:$0xff]
    %v84 = vld [vmem:[#allocation2 + $0x10] sm:$0xff]
    %v85 = vld [vmem:[#allocation2 + $0x18] sm:$0xff]
    %v86 = vld [vmem:[#allocation2 + $0x20] sm:$0xff]
    %v87 = vld [vmem:[#allocation2 + $0x28] sm:$0xff]
    %v88 = vld [vmem:[#allocation3] sm:$0xf]
    %v89 = vld [vmem:[#allocation3 + $0x4] sm:$0xf]
    %v90 = vld [vmem:[#allocation6] sm:$0xff]
    %v91 = vld [vmem:[#allocation6 + $0x8] sm:$0xf]
    %v92 = vld [vmem:[#allocation6 + $0xc] sm:$0xff]
    %v93 = vld [vmem:[#allocation6 + $0x14] sm:$0xf]
    %v94 = vld [vmem:[#allocation6 + $0x18] sm:$0xff]
    %v95 = vld [vmem:[#allocation6 + $0x20] sm:$0xf]
    %v96 = vld [vmem:[#allocation6 + $0x24] sm:$0xff]
    %v97 = vld [vmem:[#allocation6 + $0x2c] sm:$0xf]
    %v100 = vunpack.c.l.b16 %v88
    %v101 = vunpack.c.l.b16 %v89
    %v102 = vpack.c.b16 %v101, %v100
    %v111 = vunpack.c.l.b16 %v90
    %v112 = vunpack.c.h.b16 %v90
    %v113 = vunpack.c.l.b16 %v91
    %v114 = vunpack.c.l.b16 %v92
    %v115 = vunpack.c.h.b16 %v92
    %v116 = vunpack.c.l.b16 %v93
    %v117 = vunpack.c.l.b16 %v94
    %v118 = vunpack.c.h.b16 %v94
    %v119 = vunpack.c.l.b16 %v95
    %v120 = vunpack.c.l.b16 %v96
    %v121 = vunpack.c.h.b16 %v96
    %v122 = vunpack.c.l.b16 %v97
    %v123 = vpack.c.b16 %v114, %v111
    %v124 = vpack.c.b16 %v115, %v112
    %v125 = vpack.c.b16 %v116, %v113
    %v126 = vpack.c.b16 %v120, %v117
    %v127 = vpack.c.b16 %v121, %v118
    %v128 = vpack.c.b16 %v122, %v119
    %vm135 = vcmask 261120
    %v137 = vsel %vm135, %v102, 0
    %139 = vmatprep.subr.bf16.mxu0 %v124
    %140 = vmatpush1.bf16.msra.mxu0 %v123
    %141 = vmatprep.subr.bf16.mxu0 %v127
    %142 = vmatpush1.bf16.msra.mxu0 %v126
    %143 = vmatprep.subr.bf16.mxu0 0
    %144 = vmatpush1.bf16.msra.mxu0 0
    %145 = vmatprep.subr.bf16.mxu0 0
    %146 = vmatpush1.bf16.msra.mxu0 0
    %147 = vmatprep.subr.bf16.mxu0 0
    %148 = vmatpush1.bf16.msra.mxu0 0
    %149 = vmatprep.subr.bf16.mxu0 0
    %150 = vmatpush1.bf16.msra.mxu0 0
    %151 = vmatprep.subr.bf16.mxu0 0
    %152 = vmatpush1.bf16.msra.mxu0 0
    %153 = vmatprep.subr.bf16.mxu0 0
    %154 = vmatpush1.bf16.msra.mxu0 0
    %155 = vmatprep.subr.bf16.mxu0 0
    %156 = vmatpush1.bf16.msra.mxu0 0
    %157 = vmatprep.subr.bf16.mxu0 0
    %158 = vmatpush1.bf16.msra.mxu0 0
    %159 = vmatprep.subr.bf16.mxu0 0
    %160 = vmatpush1.bf16.msra.mxu0 0
    %161 = vmatprep.subr.bf16.mxu0 0
    %162 = vmatpush1.bf16.msra.mxu0 0
    %163 = vmatprep.subr.bf16.mxu0 0
    %164 = vmatpush1.bf16.msra.mxu0 0
    %165 = vmatprep.subr.bf16.mxu0 0
    %166 = vmatpush1.bf16.msra.mxu0 0
    %167 = vmatprep.subr.bf16.mxu0 0
    %168 = vmatpush1.bf16.msra.mxu0 0
    %169 = vmatprep.subr.bf16.mxu0 0
    %170 = vmatpush1.bf16.msra.mxu0 0
    %171 = vmatprep.mubr.bf16.mxu0 0
    %172 = vmatmul.mubr.bf16.gmra.mrb[0].mxu0 %v137
    %v173 = vpop.f32.mrb[0].mxu0
    %v174 = vadd.f32 0.0, %v173
    %v175 = vpop.f32.mrb[0].mxu0
    %v176 = vadd.f32 0.0, %v175
    %v177 = vpop.f32.mrb[0].mxu0
    %v178 = vadd.f32 0.0, %v177
    %v179 = vpop.f32.mrb[0].mxu0
    %v180 = vadd.f32 0.0, %v179
    %181 = vdwg.mxu0
    %182 = vmatprep.subr.bf16.mxu0 0
    %183 = vmatpush1.bf16.msra.mxu0 %v125
    %184 = vmatprep.subr.bf16.mxu0 0
    %185 = vmatpush1.bf16.msra.mxu0 %v128
    %186 = vmatprep.subr.bf16.mxu0 0
    %187 = vmatpush1.bf16.msra.mxu0 0
    %188 = vmatprep.subr.bf16.mxu0 0
    %189 = vmatpush1.bf16.msra.mxu0 0
    %190 = vmatprep.subr.bf16.mxu0 0
    %191 = vmatpush1.bf16.msra.mxu0 0
    %192 = vmatprep.subr.bf16.mxu0 0
    %193 = vmatpush1.bf16.msra.mxu0 0
    %194 = vmatprep.subr.bf16.mxu0 0
    %195 = vmatpush1.bf16.msra.mxu0 0
    %196 = vmatprep.subr.bf16.mxu0 0
    %197 = vmatpush1.bf16.msra.mxu0 0
    %198 = vmatprep.subr.bf16.mxu0 0
    %199 = vmatpush1.bf16.msra.mxu0 0
    %200 = vmatprep.subr.bf16.mxu0 0
    %201 = vmatpush1.bf16.msra.mxu0 0
    %202 = vmatprep.subr.bf16.mxu0 0
    %203 = vmatpush1.bf16.msra.mxu0 0
    %204 = vmatprep.subr.bf16.mxu0 0
    %205 = vmatpush1.bf16.msra.mxu0 0
    %206 = vmatprep.subr.bf16.mxu0 0
    %207 = vmatpush1.bf16.msra.mxu0 0
    %208 = vmatprep.subr.bf16.mxu0 0
    %209 = vmatpush1.bf16.msra.mxu0 0
    %210 = vmatprep.subr.bf16.mxu0 0
    %211 = vmatpush1.bf16.msra.mxu0 0
    %212 = vmatprep.subr.bf16.mxu0 0
    %213 = vmatpush1.bf16.msra.mxu0 0
    %214 = vmatprep.mubr.bf16.mxu0 0
    %215 = vmatmul.mubr.bf16.gmra.mrb[0].mxu0 %v137
    %v216 = vpop.f32.mrb[0].mxu0
    %v217 = vadd.f32 0.0, %v216
    %v218 = vpop.f32.mrb[0].mxu0
    %v219 = vpop.f32.mrb[0].mxu0
    %v220 = vadd.f32 0.0, %v219
    %v221 = vpop.f32.mrb[0].mxu0
    %222 = vdwg.mxu0
    %v223 = vadd.f32 %v82, %v174
    %v224 = vadd.f32 %v83, %v176
    %v225 = vadd.f32 %v84, %v217
    %v226 = vadd.f32 %v85, %v178
    %v227 = vadd.f32 %v86, %v180
    %v228 = vadd.f32 %v87, %v220
    %229 = vst [vmem:[#allocation2] sm:$0xff] %v223
    %230 = vst [vmem:[#allocation2 + $0x8] sm:$0xff] %v224
    %231 = vst [vmem:[#allocation2 + $0x10] sm:$0xff] %v225
    %232 = vst [vmem:[#allocation2 + $0x18] sm:$0xff] %v226
    %233 = vst [vmem:[#allocation2 + $0x20] sm:$0xff] %v227
    %234 = vst [vmem:[#allocation2 + $0x28] sm:$0xff] %v228
    // Predicated region
    $region30: #{transformer_encoder.8} parent=1 // pred_check
      %p235 = pneg %p55
    $region31: #{transformer_encoder.8} parent=1 // pred_check_branch
      %237 = sbr.rel (%p235) target = $region33
    $region32: #{transformer_encoder.8} parent=1 // pred_region
      %v238 = vld [vmem:[#allocation2] sm:$0xff]
      %v239 = vld [vmem:[#allocation2 + $0x8] sm:$0xff]
      %v240 = vld [vmem:[#allocation2 + $0x10] sm:$0xff]
      %v241 = vld [vmem:[#allocation2 + $0x18] sm:$0xff]
      %v242 = vld [vmem:[#allocation2 + $0x20] sm:$0xff]
      %v243 = vld [vmem:[#allocation2 + $0x28] sm:$0xff]
      %v244 = vpack.c.bf16 %v241, %v238
      %v245 = vpack.c.bf16 %v242, %v239
      %v246 = vpack.c.bf16 %v243, %v240
      %v250 = vunpack.c.l.b16 %v244
      %v251 = vunpack.c.l.b16 %v245
      %v252 = vunpack.c.l.b16 %v246
      %v253 = vunpack.c.h.b16 %v244
      %v254 = vunpack.c.h.b16 %v245
      %v255 = vunpack.c.h.b16 %v246
      %v256 = vpack.c.b16 %v251, %v250
      %v257 = vpack.c.b16 %v252, %v252
      %v258 = vpack.c.b16 %v254, %v253
      %v259 = vpack.c.b16 %v255, %v255
      %264 = vst [vmem:[#allocation9] sm:$0xff] %v256
      %265 = vst [vmem:[#allocation9 + $0x8] sm:$0xf] %v257
      %266 = vst [vmem:[#allocation9 + $0xc] sm:$0xff] %v258
      %267 = vst [vmem:[#allocation9 + $0x14] sm:$0xf] %v259
    $region33: #{transformer_encoder.8} parent=1 // pred_fallthru
      _
    // Predicated region
    $region34: #{transformer_encoder.8} parent=1 // pred_check
      _
    $region35: #{transformer_encoder.8} parent=1 // pred_check_branch
      %269 = sbr.rel (0) target = $region37
    $region36: #{transformer_encoder.8} parent=1 // pred_region
      %s271 = ssub.s32 384, 384
      %272 = vsyncadd [#allocation5], %s271
      %s273 = sshll.u32 [#allocation9], 4
      %s274 = int_to_ptr.vmem [resolvable:$true] %s273
      %279 = dma.vmem_to_hbm [thread:$0]  %s274, 384, %s3, [#allocation5], 192, 192, 12
    $region37: #{transformer_encoder.8} parent=1 // pred_fallthru
      _
    // Predicated region
    $region38: #{transformer_encoder.8} parent=1 // pred_check
      _
    $region39: #{transformer_encoder.8} parent=1 // pred_check_branch
      %281 = sbr.rel (0) target = $region41
    $region40: #{transformer_encoder.8} parent=1 // pred_region
      %282 = dma.done [#allocation5], 384
    $region41: #{transformer_encoder.8} parent=1 // pred_fallthru
      _
    %283 = vsyncpa [#allocation4], 1
    %284 = vsyncpa [#allocation7], 1
    %285 = vsyncpa [#allocation5], 1

// kernel: transformer_encoder.10
$region0: #{transformer_encoder.10}
  #allocation0 [shape = 'u32[]', space=smem, size = 0x4, offset = 0x4, fixed_abs, tag = 'smem constant byte address 0x4 - core index']
  #allocation1 [shape = 'u32[144,128]{1,0:T(1,128)}', space=vmem, size = 0x12000, scoped, tag = 'internal scratch']
  #allocation2 [shape = 'f32[16,32]{1,0:T(8,128)}', space=vmem, size = 0x2000, scoped, tag = 'scratch operand']
  %s0 = inlined_call_operand.hbm [shape: bf16[16,128], index: 0, kind: input, shape index: {}]
  %s1 = inlined_call_operand.hbm [shape: bf16[128,32], index: 1, kind: input, shape index: {}]
  %s2 = inlined_call_operand.hbm [shape: f32[1,32], index: 2, kind: input, shape index: {}]
  %s3 = inlined_call_operand.hbm [shape: bf16[16,32], index: 3, kind: input, shape index: {}]
  %s4 = inlined_call_operand.hbm [shape: f32[1,32], index: 4, kind: input, shape index: {}]
  %s5 = inlined_call_operand.hbm [shape: f32[1,32], index: 5, kind: input, shape index: {}]
  %s6 = inlined_call_operand.hbm [shape: bf16[16,32], index: 6, kind: output, shape index: {}]
  %s7 = sld [smem:[#allocation0]]
  $region66: #{transformer_encoder.10} parent=0
    _
  %s9 = ssub.s32 1, %s7
  %s10 = scalar_select 0, %s9, %s7
  $region1: #{transformer_encoder.10} parent=0
    #allocation3 [shape = 'u8[4096]{0}', space=vmem, size = 0x1000, scoped, tag = 'input window, operand 0, single buffered']
    #allocation4 [shape = 's32[1]{0}', space=sflag, size = 0x4, scoped, tag = 'scoped memory for transformer_encoder.10']
    #allocation5 [shape = 's32[1]{0}', space=sflag, size = 0x4, scoped, tag = 'scoped memory for transformer_encoder.10']
    #allocation6 [shape = 'u8[32768]{0}', space=vmem, size = 0x8000, scoped, tag = 'input window, operand 1, single buffered']
    #allocation7 [shape = 's32[1]{0}', space=sflag, size = 0x4, scoped, tag = 'scoped memory for transformer_encoder.10']
    #allocation8 [shape = 'u8[512]{0}', space=vmem, size = 0x400, scoped, tag = 'input window, operand 2, single buffered']
    #allocation9 [shape = 'u8[4096]{0}', space=vmem, size = 0x1000, scoped, tag = 'input window, operand 3, single buffered']
    #allocation10 [shape = 's32[1]{0}', space=sflag, size = 0x4, scoped, tag = 'scoped memory for transformer_encoder.10']
    #allocation11 [shape = 'u8[512]{0}', space=vmem, size = 0x400, scoped, tag = 'input window, operand 4, single buffered']
    #allocation12 [shape = 'u8[512]{0}', space=vmem, size = 0x400, scoped, tag = 'input window, operand 5, single buffered']
    #allocation13 [shape = 's32[1]{0}', space=sflag, size = 0x4, scoped, tag = 'scoped memory for transformer_encoder.10']
    #allocation14 [shape = 'u8[4096]{0}', space=vmem, size = 0x1000, scoped, tag = 'output window, operand 0, single buffered']
    %11 = vsyncpa [#allocation4], 0
    %12 = vsyncpa [#allocation7], 0
    %13 = vsyncpa [#allocation10], 0
    %14 = vsyncpa [#allocation13], 0
    %15 = vsyncpa [#allocation5], 0
    // Predicated region
    $region2: #{transformer_encoder.10} parent=1 // pred_check
      _
    $region3: #{transformer_encoder.10} parent=1 // pred_check_branch
      %17 = sbr.rel (0) target = $region5
    $region4: #{transformer_encoder.10} parent=1 // pred_region
      %s19 = ssub.s32 128, 128
      %20 = vsyncadd [#allocation4], %s19
      %s21 = sshll.u32 [#allocation3], 4
      %s22 = int_to_ptr.vmem [resolvable:$true] %s21
      %27 = dma.hbm_to_vmem [thread:$0]  %s0, 128, %s22, [#allocation4], 64, 64, 4
    $region5: #{transformer_encoder.10} parent=1 // pred_fallthru
      _
    // Predicated region
    $region6: #{transformer_encoder.10} parent=1 // pred_check
      _
    $region7: #{transformer_encoder.10} parent=1 // pred_check_branch
      %29 = sbr.rel (0) target = $region9
    $region8: #{transformer_encoder.10} parent=1 // pred_region
      %s31 = ssub.s32 1024, 1024
      %32 = vsyncadd [#allocation7], %s31
      %s33 = sshll.u32 [#allocation6], 4
      %s34 = int_to_ptr.vmem [resolvable:$true] %s33
      %39 = dma.hbm_to_vmem [thread:$0]  %s1, 1024, %s34, [#allocation7], 64, 64, 4
    $region9: #{transformer_encoder.10} parent=1 // pred_fallthru
      _
    // Predicated region
    $region10: #{transformer_encoder.10} parent=1 // pred_check
      _
    $region11: #{transformer_encoder.10} parent=1 // pred_check_branch
      %41 = sbr.rel (0) target = $region13
    $region12: #{transformer_encoder.10} parent=1 // pred_region
      %s43 = ssub.s32 16, 16
      %44 = vsyncadd [#allocation7], %s43
      %s46 = sshll.u32 [#allocation8], 4
      %s47 = int_to_ptr.vmem [resolvable:$true] %s46
      %49 = dma.hbm_to_vmem [thread:$0]  %s2, 16, %s47, [#allocation7]
    $region13: #{transformer_encoder.10} parent=1 // pred_fallthru
      _
    // Predicated region
    $region14: #{transformer_encoder.10} parent=1 // pred_check
      _
    $region15: #{transformer_encoder.10} parent=1 // pred_check_branch
      %51 = sbr.rel (0) target = $region17
    $region16: #{transformer_encoder.10} parent=1 // pred_region
      %s53 = ssub.s32 128, 128
      %54 = vsyncadd [#allocation10], %s53
      %s55 = sshll.u32 [#allocation9], 4
      %s56 = int_to_ptr.vmem [resolvable:$true] %s55
      %61 = dma.hbm_to_vmem [thread:$0]  %s3, 128, %s56, [#allocation10], 64, 64, 4
    $region17: #{transformer_encoder.10} parent=1 // pred_fallthru
      _
    // Predicated region
    $region18: #{transformer_encoder.10} parent=1 // pred_check
      _
    $region19: #{transformer_encoder.10} parent=1 // pred_check_branch
      %63 = sbr.rel (0) target = $region21
    $region20: #{transformer_encoder.10} parent=1 // pred_region
      %s65 = ssub.s32 16, 16
      %66 = vsyncadd [#allocation10], %s65
      %s68 = sshll.u32 [#allocation11], 4
      %s69 = int_to_ptr.vmem [resolvable:$true] %s68
      %71 = dma.hbm_to_vmem [thread:$0]  %s4, 16, %s69, [#allocation10]
    $region21: #{transformer_encoder.10} parent=1 // pred_fallthru
      _
    // Predicated region
    $region22: #{transformer_encoder.10} parent=1 // pred_check
      _
    $region23: #{transformer_encoder.10} parent=1 // pred_check_branch
      %73 = sbr.rel (0) target = $region25
    $region24: #{transformer_encoder.10} parent=1 // pred_region
      %s75 = ssub.s32 16, 16
      %76 = vsyncadd [#allocation13], %s75
      %s78 = sshll.u32 [#allocation12], 4
      %s79 = int_to_ptr.vmem [resolvable:$true] %s78
      %81 = dma.hbm_to_vmem [thread:$0]  %s5, 16, %s79, [#allocation13]
    $region25: #{transformer_encoder.10} parent=1 // pred_fallthru
      _
    // Predicated region
    $region26: #{transformer_encoder.10} parent=1 // pred_check
      _
    $region27: #{transformer_encoder.10} parent=1 // pred_check_branch
      %83 = sbr.rel (0) target = $region29
    $region28: #{transformer_encoder.10} parent=1 // pred_region
      %84 = dma.done [#allocation4], 128
    $region29: #{transformer_encoder.10} parent=1 // pred_fallthru
      _
    // Predicated region
    $region30: #{transformer_encoder.10} parent=1 // pred_check
      _
    $region31: #{transformer_encoder.10} parent=1 // pred_check_branch
      %86 = sbr.rel (0) target = $region33
    $region32: #{transformer_encoder.10} parent=1 // pred_region
      %87 = dma.done [#allocation7], 1024
    $region33: #{transformer_encoder.10} parent=1 // pred_fallthru
      _
    // Predicated region
    $region34: #{transformer_encoder.10} parent=1 // pred_check
      _
    $region35: #{transformer_encoder.10} parent=1 // pred_check_branch
      %89 = sbr.rel (0) target = $region37
    $region36: #{transformer_encoder.10} parent=1 // pred_region
      %90 = dma.done [#allocation7], 16
    $region37: #{transformer_encoder.10} parent=1 // pred_fallthru
      _
    // Predicated region
    $region38: #{transformer_encoder.10} parent=1 // pred_check
      _
    $region39: #{transformer_encoder.10} parent=1 // pred_check_branch
      %92 = sbr.rel (0) target = $region41
    $region40: #{transformer_encoder.10} parent=1 // pred_region
      %93 = dma.done [#allocation10], 128
    $region41: #{transformer_encoder.10} parent=1 // pred_fallthru
      _
    // Predicated region
    $region42: #{transformer_encoder.10} parent=1 // pred_check
      _
    $region43: #{transformer_encoder.10} parent=1 // pred_check_branch
      %95 = sbr.rel (0) target = $region45
    $region44: #{transformer_encoder.10} parent=1 // pred_region
      %96 = dma.done [#allocation10], 16
    $region45: #{transformer_encoder.10} parent=1 // pred_fallthru
      _
    // Predicated region
    $region46: #{transformer_encoder.10} parent=1 // pred_check
      _
    $region47: #{transformer_encoder.10} parent=1 // pred_check_branch
      %98 = sbr.rel (0) target = $region49
    $region48: #{transformer_encoder.10} parent=1 // pred_region
      %99 = dma.done [#allocation13], 16
    $region49: #{transformer_encoder.10} parent=1 // pred_fallthru
      _
    %p101 = scmp.eq.s32.totalorder 0, 0
    // Predicated region
    $region50: #{transformer_encoder.10} parent=1 // pred_check
      %p102 = pneg %p101
    $region51: #{transformer_encoder.10} parent=1 // pred_check_branch
      %104 = sbr.rel (%p102) target = $region53
    $region52: #{transformer_encoder.10} parent=1 // pred_region
      %v105 = vld [vmem:[#allocation9] sm:$0xf]
      %v106 = vld [vmem:[#allocation9 + $0x4] sm:$0xf]
      %v107 = vunpack.c.l.bf16 %v105
      %v108 = vunpack.c.l.bf16 %v106
      %v109 = vld [vmem:[#allocation8] sm:$0x1]
      %v111 = vlaneseq
      %v112 = vshrl.u32 %v111, 7
      %v113 = vsub.s32 0, %v112
      %v114 = vrot.slane %v109, %v113
      %v116 = vadd.f32 %v107, %v114
      %v117 = vadd.f32 %v108, %v114
      %vm118 = vcmask 261120
      %119 = vst.msk [vmem:[#allocation2] sm:$0xff] %vm118, %v116
      %120 = vst.msk [vmem:[#allocation2 + $0x8] sm:$0xff] %vm118, %v117
    $region53: #{transformer_encoder.10} parent=1 // pred_fallthru
      _
    %v121 = vld [vmem:[#allocation2] sm:$0xff]
    %v122 = vld [vmem:[#allocation2 + $0x8] sm:$0xff]
    %v123 = vld [vmem:[#allocation3] sm:$0xf]
    %v124 = vld [vmem:[#allocation3 + $0x4] sm:$0xf]
    %v125 = vld [vmem:[#allocation6] sm:$0xf]
    %v126 = vld [vmem:[#allocation6 + $0x4] sm:$0xf]
    %v127 = vld [vmem:[#allocation6 + $0x8] sm:$0xf]
    %v128 = vld [vmem:[#allocation6 + $0xc] sm:$0xf]
    %v129 = vld [vmem:[#allocation6 + $0x10] sm:$0xf]
    %v130 = vld [vmem:[#allocation6 + $0x14] sm:$0xf]
    %v131 = vld [vmem:[#allocation6 + $0x18] sm:$0xf]
    %v132 = vld [vmem:[#allocation6 + $0x1c] sm:$0xf]
    %v133 = vld [vmem:[#allocation6 + $0x20] sm:$0xf]
    %v134 = vld [vmem:[#allocation6 + $0x24] sm:$0xf]
    %v135 = vld [vmem:[#allocation6 + $0x28] sm:$0xf]
    %v136 = vld [vmem:[#allocation6 + $0x2c] sm:$0xf]
    %v137 = vld [vmem:[#allocation6 + $0x30] sm:$0xf]
    %v138 = vld [vmem:[#allocation6 + $0x34] sm:$0xf]
    %v139 = vld [vmem:[#allocation6 + $0x38] sm:$0xf]
    %v140 = vld [vmem:[#allocation6 + $0x3c] sm:$0xf]
    %v143 = vunpack.c.l.b16 %v123
    %v144 = vunpack.c.l.b16 %v124
    %v145 = vpack.c.b16 %v144, %v143
    %v163 = vunpack.c.l.b16 %v125
    %v164 = vunpack.c.l.b16 %v126
    %v165 = vunpack.c.l.b16 %v127
    %v166 = vunpack.c.l.b16 %v128
    %v167 = vunpack.c.l.b16 %v129
    %v168 = vunpack.c.l.b16 %v130
    %v169 = vunpack.c.l.b16 %v131
    %v170 = vunpack.c.l.b16 %v132
    %v171 = vunpack.c.l.b16 %v133
    %v172 = vunpack.c.l.b16 %v134
    %v173 = vunpack.c.l.b16 %v135
    %v174 = vunpack.c.l.b16 %v136
    %v175 = vunpack.c.l.b16 %v137
    %v176 = vunpack.c.l.b16 %v138
    %v177 = vunpack.c.l.b16 %v139
    %v178 = vunpack.c.l.b16 %v140
    %v179 = vpack.c.b16 %v164, %v163
    %v180 = vpack.c.b16 %v166, %v165
    %v181 = vpack.c.b16 %v168, %v167
    %v182 = vpack.c.b16 %v170, %v169
    %v183 = vpack.c.b16 %v172, %v171
    %v184 = vpack.c.b16 %v174, %v173
    %v185 = vpack.c.b16 %v176, %v175
    %v186 = vpack.c.b16 %v178, %v177
    %195 = vmatprep.subr.bf16.mxu0 0
    %196 = vmatpush1.bf16.msra.mxu0 %v179
    %197 = vmatprep.subr.bf16.mxu0 0
    %198 = vmatpush1.bf16.msra.mxu0 %v180
    %199 = vmatprep.subr.bf16.mxu0 0
    %200 = vmatpush1.bf16.msra.mxu0 %v181
    %201 = vmatprep.subr.bf16.mxu0 0
    %202 = vmatpush1.bf16.msra.mxu0 %v182
    %203 = vmatprep.subr.bf16.mxu0 0
    %204 = vmatpush1.bf16.msra.mxu0 %v183
    %205 = vmatprep.subr.bf16.mxu0 0
    %206 = vmatpush1.bf16.msra.mxu0 %v184
    %207 = vmatprep.subr.bf16.mxu0 0
    %208 = vmatpush1.bf16.msra.mxu0 %v185
    %209 = vmatprep.subr.bf16.mxu0 0
    %210 = vmatpush1.bf16.msra.mxu0 %v186
    %211 = vmatprep.subr.bf16.mxu0 0
    %212 = vmatpush1.bf16.msra.mxu0 0
    %213 = vmatprep.subr.bf16.mxu0 0
    %214 = vmatpush1.bf16.msra.mxu0 0
    %215 = vmatprep.subr.bf16.mxu0 0
    %216 = vmatpush1.bf16.msra.mxu0 0
    %217 = vmatprep.subr.bf16.mxu0 0
    %218 = vmatpush1.bf16.msra.mxu0 0
    %219 = vmatprep.subr.bf16.mxu0 0
    %220 = vmatpush1.bf16.msra.mxu0 0
    %221 = vmatprep.subr.bf16.mxu0 0
    %222 = vmatpush1.bf16.msra.mxu0 0
    %223 = vmatprep.subr.bf16.mxu0 0
    %224 = vmatpush1.bf16.msra.mxu0 0
    %225 = vmatprep.subr.bf16.mxu0 0
    %226 = vmatpush1.bf16.msra.mxu0 0
    %227 = vmatprep.mubr.bf16.mxu0 0
    %228 = vmatmul.mubr.bf16.gmra.mrb[0].mxu0 %v145
    %v229 = vpop.f32.mrb[0].mxu0
    %v230 = vadd.f32 0.0, %v229
    %v231 = vpop.f32.mrb[0].mxu0
    %v232 = vpop.f32.mrb[0].mxu0
    %v233 = vadd.f32 0.0, %v232
    %v234 = vpop.f32.mrb[0].mxu0
    %235 = vdwg.mxu0
    %v236 = vadd.f32 %v121, %v230
    %v237 = vadd.f32 %v122, %v233
    %vm238 = vcmask 261120
    %239 = vst.msk [vmem:[#allocation2] sm:$0xff] %vm238, %v236
    %240 = vst.msk [vmem:[#allocation2 + $0x8] sm:$0xff] %vm238, %v237
    // Predicated region
    $region54: #{transformer_encoder.10} parent=1 // pred_check
      %p241 = pneg %p101
    $region55: #{transformer_encoder.10} parent=1 // pred_check_branch
      %243 = sbr.rel (%p241) target = $region57
    $region56: #{transformer_encoder.10} parent=1 // pred_region
      %v244 = vld [vmem:[#allocation2] sm:$0xff]
      %v245 = vld [vmem:[#allocation2 + $0x8] sm:$0xff]
      %v246 = vsel %vm238, %v244, 0.0
      %247 = vadd.xlane.f32.xlu0 %v246
      %v248 = vpop.xlane.xlu0 %247
      %v249 = vsel %vm238, %v245, 0.0
      %250 = vadd.xlane.f32.xlu0 %v249
      %v251 = vpop.xlane.xlu0 %250
      %v252 = vrcp.pop 32.0
      %v253 = vmul.f32 %v248, %v252
      %v254 = vmul.f32 %v251, %v252
      %v255 = vsub.f32 %v244, %v253
      %v256 = vsub.f32 %v245, %v254
      %v257 = vmul.f32 %v255, %v255
      %v258 = vmul.f32 %v256, %v256
      %v259 = vsel %vm238, %v257, 0.0
      %260 = vadd.xlane.f32.xlu0 %v259
      %v261 = vpop.xlane.xlu0 %260
      %v262 = vsel %vm238, %v258, 0.0
      %263 = vadd.xlane.f32.xlu0 %v262
      %v264 = vpop.xlane.xlu0 %263
      %v265 = vmul.f32 %v261, %v252
      %v266 = vmul.f32 %v264, %v252
      %v267 = vadd.f32 %v265, 1e-05
      %v268 = vadd.f32 %v266, 1e-05
      %v269 = vrsqrt.pop %v267
      %v270 = vrsqrt.pop %v268
      %v271 = vmul.f32 %v255, %v269
      %v272 = vmul.f32 %v256, %v270
      %v273 = vld [vmem:[#allocation11] sm:$0x1]
      %v275 = vlaneseq
      %v276 = vshrl.u32 %v275, 7
      %v277 = vsub.s32 0, %v276
      %v278 = vrot.slane %v273, %v277
      %v280 = vmul.f32 %v271, %v278
      %v281 = vmul.f32 %v272, %v278
      %v282 = vld [vmem:[#allocation12] sm:$0x1]
      %v284 = vlaneseq
      %v285 = vshrl.u32 %v284, 7
      %v286 = vsub.s32 0, %v285
      %v287 = vrot.slane %v282, %v286
      %v289 = vadd.f32 %v280, %v287
      %v290 = vadd.f32 %v281, %v287
      %v291 = vpack.c.bf16 %v290, %v289
      %v293 = vunpack.c.l.b16 %v291
      %v294 = vunpack.c.h.b16 %v291
      %v295 = vpack.c.b16 %v293, %v293
      %v296 = vpack.c.b16 %v294, %v294
      %vm299 = vcmask 257024
      %300 = vst.msk [vmem:[#allocation14] sm:$0xf] %vm299, %v295
      %301 = vst.msk [vmem:[#allocation14 + $0x4] sm:$0xf] %vm299, %v296
    $region57: #{transformer_encoder.10} parent=1 // pred_fallthru
      _
    // Predicated region
    $region58: #{transformer_encoder.10} parent=1 // pred_check
      _
    $region59: #{transformer_encoder.10} parent=1 // pred_check_branch
      %303 = sbr.rel (0) target = $region61
    $region60: #{transformer_encoder.10} parent=1 // pred_region
      %s305 = ssub.s32 128, 128
      %306 = vsyncadd [#allocation5], %s305
      %s307 = sshll.u32 [#allocation14], 4
      %s308 = int_to_ptr.vmem [resolvable:$true] %s307
      %313 = dma.vmem_to_hbm [thread:$0]  %s308, 128, %s6, [#allocation5], 64, 64, 4
    $region61: #{transformer_encoder.10} parent=1 // pred_fallthru
      _
    // Predicated region
    $region62: #{transformer_encoder.10} parent=1 // pred_check
      _
    $region63: #{transformer_encoder.10} parent=1 // pred_check_branch
      %315 = sbr.rel (0) target = $region65
    $region64: #{transformer_encoder.10} parent=1 // pred_region
      %316 = dma.done [#allocation5], 128
    $region65: #{transformer_encoder.10} parent=1 // pred_fallthru
      _
    %317 = vsyncpa [#allocation4], 1
    %318 = vsyncpa [#allocation7], 1
    %319 = vsyncpa [#allocation10], 1
    %320 = vsyncpa [#allocation13], 1
    %321 = vsyncpa [#allocation5], 1

// kernel: transformer_encoder.9
$region0: #{transformer_encoder.9}
  #allocation0 [shape = 'u32[]', space=smem, size = 0x4, offset = 0x4, fixed_abs, tag = 'smem constant byte address 0x4 - core index']
  #allocation1 [shape = 'u32[144,128]{1,0:T(1,128)}', space=vmem, size = 0x12000, scoped, tag = 'internal scratch']
  #allocation2 [shape = 'f32[4,8,1]{2,1,0:T(8,128)}', space=vmem, size = 0x4000, scoped, tag = 'scratch operand']
  #allocation3 [shape = 'f32[4,8,1]{2,1,0:T(8,128)}', space=vmem, size = 0x4000, scoped, tag = 'scratch operand']
  #allocation4 [shape = 'f32[4,8,32]{2,1,0:T(8,128)}', space=vmem, size = 0x4000, scoped, tag = 'scratch operand']
  %s0 = inlined_call_operand.hbm [shape: bf16[2,4,8,32], index: 0, kind: input, shape index: {}]
  %s1 = inlined_call_operand.hbm [shape: bf16[2,4,8,32], index: 1, kind: input, shape index: {}]
  %s2 = inlined_call_operand.hbm [shape: bf16[2,4,8,32], index: 2, kind: input, shape index: {}]
  %s3 = inlined_call_operand.hbm [shape: bf16[2,8,128], index: 3, kind: output, shape index: {}]
  %s4 = sld [smem:[#allocation0]]
  $region65: #{transformer_encoder.9} parent=0
    _
  %s6 = ssub.s32 1, %s4
  %s7 = scalar_select 0, %s6, %s4
  $region1: #{transformer_encoder.9} parent=0
    #allocation5 [shape = 'u8[16384]{0}', space=vmem, size = 0x4000, scoped, tag = 'input window, operand 0']
    #allocation6 [shape = 's32[2]{0}', space=sflag, size = 0x8, scoped, tag = 'scoped memory for transformer_encoder.9']
    #allocation7 [shape = 's32[2]{0}', space=sflag, size = 0x8, scoped, tag = 'scoped memory for transformer_encoder.9']
    #allocation8 [shape = 'u8[16384]{0}', space=vmem, size = 0x4000, scoped, tag = 'input window, operand 1']
    #allocation9 [shape = 's32[2]{0}', space=sflag, size = 0x8, scoped, tag = 'scoped memory for transformer_encoder.9']
    #allocation10 [shape = 'u8[16384]{0}', space=vmem, size = 0x4000, scoped, tag = 'input window, operand 2']
    #allocation11 [shape = 'u8[4096]{0}', space=vmem, size = 0x1000, scoped, tag = 'output window, operand 0']
    %8 = vsyncpa [#allocation6], 0
    %s9 = scalar_lea.sflag [#allocation6], 1
    %10 = vsyncpa %s9, 0
    %11 = vsyncpa [#allocation9], 0
    %s12 = scalar_lea.sflag [#allocation9], 1
    %13 = vsyncpa %s12, 0
    %14 = vsyncpa [#allocation7], 0
    %s15 = scalar_lea.sflag [#allocation7], 1
    %16 = vsyncpa %s15, 0
    loop: start=0, step=1, limit=4
    $region2: #{transformer_encoder.9} parent=1 // loop_pre_header
      _
    $region3: #{transformer_encoder.9} parent=1 // loop_header
      %s18 = sphi 0, %s22
      %p19 = scmp.ge.s32.totalorder %s18, 4
      %s25 = sphi 0, %s44
      %s26 = sphi 0, %s40
      %s27 = sphi 0, %s36
      %s28 = sphi 0, %s25
      %s29 = sphi 0, %s26
      %s30 = sphi 0, %s27
      %s31 = sphi 0, %s28
      %s32 = sphi 0, %s29
      %s33 = sphi 0, %s30
      %s49 = sphi 0, %s51
      %s52 = sphi 0, %s49
      %s53 = sphi 0, %s52
      %s69 = sphi 0, %s53
      %s77 = sphi 0, %s79
      %s80 = sphi 0, %s77
      %s81 = sphi 0, %s80
      %s97 = sphi 0, %s81
      %s105 = sphi 0, %s107
      %s108 = sphi 0, %s105
      %s109 = sphi 0, %s108
      %s125 = sphi 0, %s109
      %s133 = sphi 0, %s135
      %s136 = sphi 0, %s133
      %s137 = sphi 0, %s136
      %s153 = sphi 0, %s137
    $region4: #{transformer_encoder.9} parent=1 // loop_header_branch
      %21 = sbr.rel (%p19) target = $region8
    $region5: #{transformer_encoder.9} parent=1 // loop_body
      %s23 = ssub.s32 %s18, 1
      %s24 = ssub.s32 %s18, 2
      %s34 = sadd.s32 1, %s27
      %p35 = scmp.ge.s32.totalorder %s34, 1
      %s36 = scalar_select %p35, 0, %s34
      %s37 = sadd.s32 1, %s26
      %s38 = scalar_select %p35, %s37, %s26
      %p39 = scmp.ge.s32.totalorder %s38, 1
      %s40 = scalar_select %p39, 0, %s38
      %s41 = sadd.s32 1, %s25
      %s42 = scalar_select %p39, %s41, %s25
      %p43 = scmp.ge.s32.totalorder %s42, 2
      %s44 = scalar_select %p43, 0, %s42
      %s45 = ssub.s32 %s25, %s44
      %s46 = ssub.s32 %s26, %s40
      %s47 = sor.u32 %s45, %s46
      %p48 = scmp.eq.s32.totalorder %s47, 0
      %s50 = sadd.s32 %s49, 1
      %s51 = scalar_select %p48, %s49, %s50
      %p54 = pneg %p48
      %p55 = scmp.eq.s32.totalorder %s18, 1
      %p56 = por %p54, %p55
      %p57 = scmp.ne.s32.totalorder %s49, %s52
      %p58 = scmp.eq.s32.totalorder %s18, 0
      %p59 = por %p57, %p58
      %p60 = scmp.ne.s32.totalorder %s49, %s52
      %p61 = scmp.eq.s32.totalorder %s23, 1
      %p62 = por %p60, %p61
      %p63 = scmp.ne.s32.totalorder %s52, %s53
      %p64 = scmp.eq.s32.totalorder %s23, 0
      %p65 = por %p63, %p64
      %p66 = scmp.ne.s32.totalorder %s52, %s53
      %p67 = scmp.eq.s32.totalorder %s24, 1
      %p68 = por %p66, %p67
      %p70 = scmp.ne.s32.totalorder %s53, %s69
      %p71 = scmp.eq.s32.totalorder %s24, 0
      %p72 = por %p70, %p71
      %s73 = ssub.s32 %s25, %s44
      %s74 = ssub.s32 %s27, %s36
      %s75 = sor.u32 %s73, %s74
      %p76 = scmp.eq.s32.totalorder %s75, 0
      %s78 = sadd.s32 %s77, 1
      %s79 = scalar_select %p76, %s77, %s78
      %p82 = pneg %p76
      %p83 = scmp.eq.s32.totalorder %s18, 1
      %p84 = por %p82, %p83
      %p85 = scmp.ne.s32.totalorder %s77, %s80
      %p86 = scmp.eq.s32.totalorder %s18, 0
      %p87 = por %p85, %p86
      %p88 = scmp.ne.s32.totalorder %s77, %s80
      %p89 = scmp.eq.s32.totalorder %s23, 1
      %p90 = por %p88, %p89
      %p91 = scmp.ne.s32.totalorder %s80, %s81
      %p92 = scmp.eq.s32.totalorder %s23, 0
      %p93 = por %p91, %p92
      %p94 = scmp.ne.s32.totalorder %s80, %s81
      %p95 = scmp.eq.s32.totalorder %s24, 1
      %p96 = por %p94, %p95
      %p98 = scmp.ne.s32.totalorder %s81, %s97
      %p99 = scmp.eq.s32.totalorder %s24, 0
      %p100 = por %p98, %p99
      %s101 = ssub.s32 %s25, %s44
      %s102 = ssub.s32 %s27, %s36
      %s103 = sor.u32 %s101, %s102
      %p104 = scmp.eq.s32.totalorder %s103, 0
      %s106 = sadd.s32 %s105, 1
      %s107 = scalar_select %p104, %s105, %s106
      %p110 = pneg %p104
      %p111 = scmp.eq.s32.totalorder %s18, 1
      %p112 = por %p110, %p111
      %p113 = scmp.ne.s32.totalorder %s105, %s108
      %p114 = scmp.eq.s32.totalorder %s18, 0
      %p115 = por %p113, %p114
      %p116 = scmp.ne.s32.totalorder %s105, %s108
      %p117 = scmp.eq.s32.totalorder %s23, 1
      %p118 = por %p116, %p117
      %p119 = scmp.ne.s32.totalorder %s108, %s109
      %p120 = scmp.eq.s32.totalorder %s23, 0
      %p121 = por %p119, %p120
      %p122 = scmp.ne.s32.totalorder %s108, %s109
      %p123 = scmp.eq.s32.totalorder %s24, 1
      %p124 = por %p122, %p123
      %p126 = scmp.ne.s32.totalorder %s109, %s125
      %p127 = scmp.eq.s32.totalorder %s24, 0
      %p128 = por %p126, %p127
      %s129 = ssub.s32 %s25, %s44
      %s130 = ssub.s32 %s26, %s40
      %s131 = sor.u32 %s129, %s130
      %p132 = scmp.eq.s32.totalorder %s131, 0
      %s134 = sadd.s32 %s133, 1
      %s135 = scalar_select %p132, %s133, %s134
      %p138 = pneg %p132
      %p139 = scmp.eq.s32.totalorder %s18, 1
      %p140 = por %p138, %p139
      %p141 = scmp.ne.s32.totalorder %s133, %s136
      %p142 = scmp.eq.s32.totalorder %s18, 0
      %p143 = por %p141, %p142
      %p144 = scmp.ne.s32.totalorder %s133, %s136
      %p145 = scmp.eq.s32.totalorder %s23, 1
      %p146 = por %p144, %p145
      %p147 = scmp.ne.s32.totalorder %s136, %s137
      %p148 = scmp.eq.s32.totalorder %s23, 0
      %p149 = por %p147, %p148
      %p150 = scmp.ne.s32.totalorder %s136, %s137
      %p151 = scmp.eq.s32.totalorder %s24, 1
      %p152 = por %p150, %p151
      %p154 = scmp.ne.s32.totalorder %s137, %s153
      %p155 = scmp.eq.s32.totalorder %s24, 0
      %p156 = por %p154, %p155
      %p157 = scmp.le.s32.totalorder 1, %s18
      %p158 = scmp.lt.s32.totalorder %s18, 3
      %p159 = pnand %p157, %p158
      %p160 = pneg %p159
      // Predicated region
      $region9: #{transformer_encoder.9} parent=5 // pred_check
        _
      $region10: #{transformer_encoder.9} parent=5 // pred_check_branch
        %162 = sbr.rel (%p159) target = $region12
      $region11: #{transformer_encoder.9} parent=5 // pred_region
        %s163 = ssub.s32 %s18, 1
      $region12: #{transformer_encoder.9} parent=5 // pred_fallthru
        _
      %p164 = scmp.lt.s32.totalorder %s18, 2
      // Predicated region
      $region13: #{transformer_encoder.9} parent=5 // pred_check
        %p165 = pneg %p164
      $region14: #{transformer_encoder.9} parent=5 // pred_check_branch
        %167 = sbr.rel (%p165) target = $region16
      $region15: #{transformer_encoder.9} parent=5 // pred_region
        // Predicated region
        $region17: #{transformer_encoder.9} parent=15 // pred_check
          %p168 = pneg %p59
        $region18: #{transformer_encoder.9} parent=15 // pred_check_branch
          %170 = sbr.rel (%p168) target = $region20
        $region19: #{transformer_encoder.9} parent=15 // pred_region
          %s171 = sand.u32 %s49, 1
          %s172 = scalar_lea.sflag [#allocation6], %s171
          %s173 = sand.u32 %s49, 1
          %s174 = smul.addr %s173, 16
          %s175 = scalar_lea.vmem [#allocation5], %s174
          %s177 = ssub.s32 256, 256
          %178 = vsyncadd %s172, %s177
          %s179 = smul.addr %s25, 4
          %s180 = sadd.s32 %s26, %s179
          %s181 = smul.addr %s180, 64
          %s182 = scalar_lea.hbm %s0, %s181
          %s183 = sshll.u32 %s175, 4
          %s184 = int_to_ptr.vmem [resolvable:$true] %s183
          %189 = dma.hbm_to_vmem [thread:$0]  %s182, 256, %s184, %s172, 64, 64, 4
        $region20: #{transformer_encoder.9} parent=15 // pred_fallthru
          _
        // Predicated region
        $region21: #{transformer_encoder.9} parent=15 // pred_check
          %p190 = pneg %p87
        $region22: #{transformer_encoder.9} parent=15 // pred_check_branch
          %192 = sbr.rel (%p190) target = $region24
        $region23: #{transformer_encoder.9} parent=15 // pred_region
          %s193 = sand.u32 %s18, 1
          %s194 = scalar_lea.sflag [#allocation9], %s193
          %s195 = sand.u32 %s77, 1
          %s196 = smul.addr %s195, 16
          %s197 = scalar_lea.vmem [#allocation8], %s196
          %s199 = ssub.s32 256, 256
          %200 = vsyncadd %s194, %s199
          %s201 = smul.addr %s25, 4
          %s202 = sadd.s32 %s27, %s201
          %s203 = smul.addr %s202, 64
          %s204 = scalar_lea.hbm %s1, %s203
          %s205 = sshll.u32 %s197, 4
          %s206 = int_to_ptr.vmem [resolvable:$true] %s205
          %211 = dma.hbm_to_vmem [thread:$0]  %s204, 256, %s206, %s194, 64, 64, 4
        $region24: #{transformer_encoder.9} parent=15 // pred_fallthru
          _
        // Predicated region
        $region25: #{transformer_encoder.9} parent=15 // pred_check
          %p212 = pneg %p115
        $region26: #{transformer_encoder.9} parent=15 // pred_check_branch
          %214 = sbr.rel (%p212) target = $region28
        $region27: #{transformer_encoder.9} parent=15 // pred_region
          %s215 = sand.u32 %s18, 1
          %s216 = scalar_lea.sflag [#allocation9], %s215
          %s217 = sand.u32 %s105, 1
          %s218 = smul.addr %s217, 16
          %s219 = scalar_lea.vmem [#allocation10], %s218
          %s221 = ssub.s32 256, 256
          %222 = vsyncadd %s216, %s221
          %s223 = smul.addr %s25, 4
          %s224 = sadd.s32 %s27, %s223
          %s225 = smul.addr %s224, 64
          %s226 = scalar_lea.hbm %s2, %s225
          %s227 = sshll.u32 %s219, 4
          %s228 = int_to_ptr.vmem [resolvable:$true] %s227
          %233 = dma.hbm_to_vmem [thread:$0]  %s226, 256, %s228, %s216, 64, 64, 4
        $region28: #{transformer_encoder.9} parent=15 // pred_fallthru
          _
      $region16: #{transformer_encoder.9} parent=5 // pred_fallthru
        _
      %p234 = scmp.le.s32.totalorder 1, %s18
      %p235 = scmp.lt.s32.totalorder %s18, 3
      %p236 = pnand %p234, %p235
      %p237 = pneg %p236
      // Predicated region
      $region29: #{transformer_encoder.9} parent=5 // pred_check
        _
      $region30: #{transformer_encoder.9} parent=5 // pred_check_branch
        %239 = sbr.rel (%p236) target = $region32
      $region31: #{transformer_encoder.9} parent=5 // pred_region
        %s240 = ssub.s32 %s18, 1
        %s241 = sand.u32 %s52, 1
        %s242 = scalar_lea.sflag [#allocation6], %s241
        %s243 = sand.u32 %s52, 1
        %s244 = smul.addr %s243, 16
        %s245 = scalar_lea.vmem [#allocation5], %s244
        // Predicated region
        $region33: #{transformer_encoder.9} parent=31 // pred_check
          %p246 = pneg %p65
        $region34: #{transformer_encoder.9} parent=31 // pred_check_branch
          %248 = sbr.rel (%p246) target = $region36
        $region35: #{transformer_encoder.9} parent=31 // pred_region
          %249 = dma.done %s242, 256
        $region36: #{transformer_encoder.9} parent=31 // pred_fallthru
          _
        %s250 = sand.u32 %s23, 1
        %s251 = scalar_lea.sflag [#allocation9], %s250
        %s252 = sand.u32 %s80, 1
        %s253 = smul.addr %s252, 16
        %s254 = scalar_lea.vmem [#allocation8], %s253
        // Predicated region
        $region37: #{transformer_encoder.9} parent=31 // pred_check
          %p255 = pneg %p93
        $region38: #{transformer_encoder.9} parent=31 // pred_check_branch
          %257 = sbr.rel (%p255) target = $region40
        $region39: #{transformer_encoder.9} parent=31 // pred_region
          %258 = dma.done %s251, 256
        $region40: #{transformer_encoder.9} parent=31 // pred_fallthru
          _
        %s259 = sand.u32 %s23, 1
        %s260 = scalar_lea.sflag [#allocation9], %s259
        %s261 = sand.u32 %s108, 1
        %s262 = smul.addr %s261, 16
        %s263 = scalar_lea.vmem [#allocation10], %s262
        // Predicated region
        $region41: #{transformer_encoder.9} parent=31 // pred_check
          %p264 = pneg %p121
        $region42: #{transformer_encoder.9} parent=31 // pred_check_branch
          %266 = sbr.rel (%p264) target = $region44
        $region43: #{transformer_encoder.9} parent=31 // pred_region
          %267 = dma.done %s260, 256
        $region44: #{transformer_encoder.9} parent=31 // pred_fallthru
          _
        %s268 = sand.u32 %s52, 1
        %s269 = scalar_lea.sflag [#allocation6], %s268
        %s270 = sand.u32 %s52, 1
        %s271 = smul.addr %s270, 16
        %s272 = scalar_lea.vmem [#allocation5], %s271
        %p273 = pneg %p65
        %p274 = pneg %p62
        %s275 = sand.u32 %s23, 1
        %s276 = scalar_lea.sflag [#allocation9], %s275
        %s277 = sand.u32 %s80, 1
        %s278 = smul.addr %s277, 16
        %s279 = scalar_lea.vmem [#allocation8], %s278
        %p280 = pneg %p93
        %p281 = pneg %p90
        %s282 = sand.u32 %s23, 1
        %s283 = scalar_lea.sflag [#allocation9], %s282
        %s284 = sand.u32 %s108, 1
        %s285 = smul.addr %s284, 16
        %s286 = scalar_lea.vmem [#allocation10], %s285
        %p287 = pneg %p121
        %p288 = pneg %p118
        %p289 = pneg %p149
        %p290 = pneg %p146
        %s291 = sand.u32 %s136, 1
        %s292 = scalar_lea.sflag [#allocation7], %s291
        %s293 = sand.u32 %s136, 1
        %s294 = smul.addr %s293, 4
        %s295 = scalar_lea.vmem [#allocation11], %s294
        %p297 = scmp.eq.s32.totalorder %s30, 0
        // Predicated region
        $region45: #{transformer_encoder.9} parent=31 // pred_check
          %p298 = pneg %p297
        $region46: #{transformer_encoder.9} parent=31 // pred_check_branch
          %300 = sbr.rel (%p298) target = $region48
        $region47: #{transformer_encoder.9} parent=31 // pred_region
          %vm301 = vcmask 7168
          %302 = vst.msk [vmem:[#allocation2] sm:$0xff] %vm301, -inf
          %303 = vst.msk [vmem:[#allocation2 + $0x8] sm:$0xff] %vm301, -inf
          %304 = vst.msk [vmem:[#allocation2 + $0x10] sm:$0xff] %vm301, -inf
          %305 = vst.msk [vmem:[#allocation2 + $0x18] sm:$0xff] %vm301, -inf
          %306 = vst.msk [vmem:[#allocation3] sm:$0xff] %vm301, 0.0
          %307 = vst.msk [vmem:[#allocation3 + $0x8] sm:$0xff] %vm301, 0.0
          %308 = vst.msk [vmem:[#allocation3 + $0x10] sm:$0xff] %vm301, 0.0
          %309 = vst.msk [vmem:[#allocation3 + $0x18] sm:$0xff] %vm301, 0.0
          %vm310 = vcmask 261120
          %311 = vst.msk [vmem:[#allocation4] sm:$0xff] %vm310, 0.0
          %312 = vst.msk [vmem:[#allocation4 + $0x8] sm:$0xff] %vm310, 0.0
          %313 = vst.msk [vmem:[#allocation4 + $0x10] sm:$0xff] %vm310, 0.0
          %314 = vst.msk [vmem:[#allocation4 + $0x18] sm:$0xff] %vm310, 0.0
        $region48: #{transformer_encoder.9} parent=31 // pred_fallthru
          _
        %v315 = vld [vmem:[%s245] sm:$0xf]
        %v316 = vld [vmem:[%s245 + $0x4] sm:$0xf]
        %v317 = vld [vmem:[%s245 + $0x8] sm:$0xf]
        %v318 = vld [vmem:[%s245 + $0xc] sm:$0xf]
        %v319 = vld [vmem:[%s254] sm:$0xf]
        %v320 = vld [vmem:[%s254 + $0x4] sm:$0xf]
        %v321 = vld [vmem:[%s254 + $0x8] sm:$0xf]
        %v322 = vld [vmem:[%s254 + $0xc] sm:$0xf]
        %v323 = vld [vmem:[%s263] sm:$0xf]
        %v324 = vld [vmem:[%s263 + $0x4] sm:$0xf]
        %v325 = vld [vmem:[%s263 + $0x8] sm:$0xf]
        %v326 = vld [vmem:[%s263 + $0xc] sm:$0xf]
        %vm327 = vcmask 261120
        %v329 = vsel %vm327, %v315, 0
        %v332 = vsel %vm327, %v319, 0
        %334 = vmatprep.subr.bf16.mxu0 0
        %335 = vmatpush1.bf16.xpose.msra.mxu0 %v332
        %336 = vmatprep.subr.bf16.mxu0 0
        %337 = vmatpush1.bf16.xpose.msra.mxu0 0
        %338 = vmatprep.subr.bf16.mxu0 0
        %339 = vmatpush1.bf16.xpose.msra.mxu0 0
        %340 = vmatprep.subr.bf16.mxu0 0
        %341 = vmatpush1.bf16.xpose.msra.mxu0 0
        %342 = vmatprep.subr.bf16.mxu0 0
        %343 = vmatpush1.bf16.xpose.msra.mxu0 0
        %344 = vmatprep.subr.bf16.mxu0 0
        %345 = vmatpush1.bf16.xpose.msra.mxu0 0
        %346 = vmatprep.subr.bf16.mxu0 0
        %347 = vmatpush1.bf16.xpose.msra.mxu0 0
        %348 = vmatprep.subr.bf16.mxu0 0
        %349 = vmatpush1.bf16.xpose.msra.mxu0 0
        %350 = vmatprep.subr.bf16.mxu0 0
        %351 = vmatpush1.bf16.xpose.msra.mxu0 0
        %352 = vmatprep.subr.bf16.mxu0 0
        %353 = vmatpush1.bf16.xpose.msra.mxu0 0
        %354 = vmatprep.subr.bf16.mxu0 0
        %355 = vmatpush1.bf16.xpose.msra.mxu0 0
        %356 = vmatprep.subr.bf16.mxu0 0
        %357 = vmatpush1.bf16.xpose.msra.mxu0 0
        %358 = vmatprep.subr.bf16.mxu0 0
        %359 = vmatpush1.bf16.xpose.msra.mxu0 0
        %360 = vmatprep.subr.bf16.mxu0 0
        %361 = vmatpush1.bf16.xpose.msra.mxu0 0
        %362 = vmatprep.subr.bf16.mxu0 0
        %363 = vmatpush1.bf16.xpose.msra.mxu0 0
        %364 = vmatprep.subr.bf16.mxu0 0
        %365 = vmatpush1.bf16.xpose.msra.mxu0 0
        %366 = vmatprep.mubr.bf16.mxu0 0
        %367 = vmatmul.mubr.bf16.gmra.mrb[0].mxu0 %v329
        %v368 = vpop.f32.mrb[0].mxu0
        %v369 = vadd.f32 0.0, %v368
        %v370 = vpop.f32.mrb[0].mxu0
        %v371 = vpop.f32.mrb[0].mxu0
        %v372 = vpop.f32.mrb[0].mxu0
        %373 = vdwg.mxu0
        %v375 = vsel %vm327, %v316, 0
        %v378 = vsel %vm327, %v320, 0
        %380 = vmatprep.subr.bf16.mxu0 0
        %381 = vmatpush1.bf16.xpose.msra.mxu0 %v378
        %382 = vmatprep.subr.bf16.mxu0 0
        %383 = vmatpush1.bf16.xpose.msra.mxu0 0
        %384 = vmatprep.subr.bf16.mxu0 0
        %385 = vmatpush1.bf16.xpose.msra.mxu0 0
        %386 = vmatprep.subr.bf16.mxu0 0
        %387 = vmatpush1.bf16.xpose.msra.mxu0 0
        %388 = vmatprep.subr.bf16.mxu0 0
        %389 = vmatpush1.bf16.xpose.msra.mxu0 0
        %390 = vmatprep.subr.bf16.mxu0 0
        %391 = vmatpush1.bf16.xpose.msra.mxu0 0
        %392 = vmatprep.subr.bf16.mxu0 0
        %393 = vmatpush1.bf16.xpose.msra.mxu0 0
        %394 = vmatprep.subr.bf16.mxu0 0
        %395 = vmatpush1.bf16.xpose.msra.mxu0 0
        %396 = vmatprep.subr.bf16.mxu0 0
        %397 = vmatpush1.bf16.xpose.msra.mxu0 0
        %398 = vmatprep.subr.bf16.mxu0 0
        %399 = vmatpush1.bf16.xpose.msra.mxu0 0
        %400 = vmatprep.subr.bf16.mxu0 0
        %401 = vmatpush1.bf16.xpose.msra.mxu0 0
        %402 = vmatprep.subr.bf16.mxu0 0
        %403 = vmatpush1.bf16.xpose.msra.mxu0 0
        %404 = vmatprep.subr.bf16.mxu0 0
        %405 = vmatpush1.bf16.xpose.msra.mxu0 0
        %406 = vmatprep.subr.bf16.mxu0 0
        %407 = vmatpush1.bf16.xpose.msra.mxu0 0
        %408 = vmatprep.subr.bf16.mxu0 0
        %409 = vmatpush1.bf16.xpose.msra.mxu0 0
        %410 = vmatprep.subr.bf16.mxu0 0
        %411 = vmatpush1.bf16.xpose.msra.mxu0 0
        %412 = vmatprep.mubr.bf16.mxu0 0
        %413 = vmatmul.mubr.bf16.gmra.mrb[0].mxu0 %v375
        %v414 = vpop.f32.mrb[0].mxu0
        %v415 = vadd.f32 0.0, %v414
        %v416 = vpop.f32.mrb[0].mxu0
        %v417 = vpop.f32.mrb[0].mxu0
        %v418 = vpop.f32.mrb[0].mxu0
        %419 = vdwg.mxu0
        %v421 = vsel %vm327, %v317, 0
        %v424 = vsel %vm327, %v321, 0
        %426 = vmatprep.subr.bf16.mxu0 0
        %427 = vmatpush1.bf16.xpose.msra.mxu0 %v424
        %428 = vmatprep.subr.bf16.mxu0 0
        %429 = vmatpush1.bf16.xpose.msra.mxu0 0
        %430 = vmatprep.subr.bf16.mxu0 0
        %431 = vmatpush1.bf16.xpose.msra.mxu0 0
        %432 = vmatprep.subr.bf16.mxu0 0
        %433 = vmatpush1.bf16.xpose.msra.mxu0 0
        %434 = vmatprep.subr.bf16.mxu0 0
        %435 = vmatpush1.bf16.xpose.msra.mxu0 0
        %436 = vmatprep.subr.bf16.mxu0 0
        %437 = vmatpush1.bf16.xpose.msra.mxu0 0
        %438 = vmatprep.subr.bf16.mxu0 0
        %439 = vmatpush1.bf16.xpose.msra.mxu0 0
        %440 = vmatprep.subr.bf16.mxu0 0
        %441 = vmatpush1.bf16.xpose.msra.mxu0 0
        %442 = vmatprep.subr.bf16.mxu0 0
        %443 = vmatpush1.bf16.xpose.msra.mxu0 0
        %444 = vmatprep.subr.bf16.mxu0 0
        %445 = vmatpush1.bf16.xpose.msra.mxu0 0
        %446 = vmatprep.subr.bf16.mxu0 0
        %447 = vmatpush1.bf16.xpose.msra.mxu0 0
        %448 = vmatprep.subr.bf16.mxu0 0
        %449 = vmatpush1.bf16.xpose.msra.mxu0 0
        %450 = vmatprep.subr.bf16.mxu0 0
        %451 = vmatpush1.bf16.xpose.msra.mxu0 0
        %452 = vmatprep.subr.bf16.mxu0 0
        %453 = vmatpush1.bf16.xpose.msra.mxu0 0
        %454 = vmatprep.subr.bf16.mxu0 0
        %455 = vmatpush1.bf16.xpose.msra.mxu0 0
        %456 = vmatprep.subr.bf16.mxu0 0
        %457 = vmatpush1.bf16.xpose.msra.mxu0 0
        %458 = vmatprep.mubr.bf16.mxu0 0
        %459 = vmatmul.mubr.bf16.gmra.mrb[0].mxu0 %v421
        %v460 = vpop.f32.mrb[0].mxu0
        %v461 = vadd.f32 0.0, %v460
        %v462 = vpop.f32.mrb[0].mxu0
        %v463 = vpop.f32.mrb[0].mxu0
        %v464 = vpop.f32.mrb[0].mxu0
        %465 = vdwg.mxu0
        %v467 = vsel %vm327, %v318, 0
        %v470 = vsel %vm327, %v322, 0
        %472 = vmatprep.subr.bf16.mxu0 0
        %473 = vmatpush1.bf16.xpose.msra.mxu0 %v470
        %474 = vmatprep.subr.bf16.mxu0 0
        %475 = vmatpush1.bf16.xpose.msra.mxu0 0
        %476 = vmatprep.subr.bf16.mxu0 0
        %477 = vmatpush1.bf16.xpose.msra.mxu0 0
        %478 = vmatprep.subr.bf16.mxu0 0
        %479 = vmatpush1.bf16.xpose.msra.mxu0 0
        %480 = vmatprep.subr.bf16.mxu0 0
        %481 = vmatpush1.bf16.xpose.msra.mxu0 0
        %482 = vmatprep.subr.bf16.mxu0 0
        %483 = vmatpush1.bf16.xpose.msra.mxu0 0
        %484 = vmatprep.subr.bf16.mxu0 0
        %485 = vmatpush1.bf16.xpose.msra.mxu0 0
        %486 = vmatprep.subr.bf16.mxu0 0
        %487 = vmatpush1.bf16.xpose.msra.mxu0 0
        %488 = vmatprep.subr.bf16.mxu0 0
        %489 = vmatpush1.bf16.xpose.msra.mxu0 0
        %490 = vmatprep.subr.bf16.mxu0 0
        %491 = vmatpush1.bf16.xpose.msra.mxu0 0
        %492 = vmatprep.subr.bf16.mxu0 0
        %493 = vmatpush1.bf16.xpose.msra.mxu0 0
        %494 = vmatprep.subr.bf16.mxu0 0
        %495 = vmatpush1.bf16.xpose.msra.mxu0 0
        %496 = vmatprep.subr.bf16.mxu0 0
        %497 = vmatpush1.bf16.xpose.msra.mxu0 0
        %498 = vmatprep.subr.bf16.mxu0 0
        %499 = vmatpush1.bf16.xpose.msra.mxu0 0
        %500 = vmatprep.subr.bf16.mxu0 0
        %501 = vmatpush1.bf16.xpose.msra.mxu0 0
        %502 = vmatprep.subr.bf16.mxu0 0
        %503 = vmatpush1.bf16.xpose.msra.mxu0 0
        %504 = vmatprep.mubr.bf16.mxu0 0
        %505 = vmatmul.mubr.bf16.gmra.mrb[0].mxu0 %v467
        %v506 = vpop.f32.mrb[0].mxu0
        %v507 = vadd.f32 0.0, %v506
        %v508 = vpop.f32.mrb[0].mxu0
        %v509 = vpop.f32.mrb[0].mxu0
        %v510 = vpop.f32.mrb[0].mxu0
        %511 = vdwg.mxu0
        %v512 = vmul.f32 %v369, 0.17677669
        %v513 = vmul.f32 %v415, 0.17677669
        %v514 = vmul.f32 %v461, 0.17677669
        %v515 = vmul.f32 %v507, 0.17677669
        %v516 = vld [vmem:[#allocation2] sm:$0xff]
        %v517 = vld [vmem:[#allocation2 + $0x8] sm:$0xff]
        %v518 = vld [vmem:[#allocation2 + $0x10] sm:$0xff]
        %v519 = vld [vmem:[#allocation2 + $0x18] sm:$0xff]
        %vm520 = vcmask 64512
        %v521 = vsel %vm520, %v512, -inf
        %522 = vmax.xlane.f32.xlu0 %v521
        %v523 = vpop.xlane.xlu0 %522
        %v524 = vsel %vm520, %v513, -inf
        %525 = vmax.xlane.f32.xlu0 %v524
        %v526 = vpop.xlane.xlu0 %525
        %v527 = vsel %vm520, %v514, -inf
        %528 = vmax.xlane.f32.xlu0 %v527
        %v529 = vpop.xlane.xlu0 %528
        %v530 = vsel %vm520, %v515, -inf
        %531 = vmax.xlane.f32.xlu0 %v530
        %v532 = vpop.xlane.xlu0 %531
        %v533 = vmax.f32 %v516, %v523
        %v534 = vmax.f32 %v517, %v526
        %v535 = vmax.f32 %v518, %v529
        %v536 = vmax.f32 %v519, %v532
        %v537 = vsub.f32 %v516, %v533
        %v538 = vsub.f32 %v517, %v534
        %v539 = vsub.f32 %v518, %v535
        %v540 = vsub.f32 %v519, %v536
        %v541 = vmul.f32 %v537, 1.442695
        %v542 = vpow.pop %v541
        %v543 = vmul.f32 %v538, 1.442695
        %v544 = vpow.pop %v543
        %v545 = vmul.f32 %v539, 1.442695
        %v546 = vpow.pop %v545
        %v547 = vmul.f32 %v540, 1.442695
        %v548 = vpow.pop %v547
        %550 = vset.pattern.permute.xlu0 0
        %551 = vperm.xlu0 %550, %v533
        %v552 = vpop.permute.xlu0 %551
        %555 = vset.pattern.permute.xlu0 0
        %556 = vperm.xlu0 %555, %v534
        %v557 = vpop.permute.xlu0 %556
        %560 = vset.pattern.permute.xlu0 0
        %561 = vperm.xlu0 %560, %v535
        %v562 = vpop.permute.xlu0 %561
        %565 = vset.pattern.permute.xlu0 0
        %566 = vperm.xlu0 %565, %v536
        %v567 = vpop.permute.xlu0 %566
        %v569 = vsub.f32 %v512, %v552
        %v570 = vsub.f32 %v513, %v557
        %v571 = vsub.f32 %v514, %v562
        %v572 = vsub.f32 %v515, %v567
        %v573 = vmul.f32 %v569, 1.442695
        %v574 = vpow.pop %v573
        %v575 = vmul.f32 %v570, 1.442695
        %v576 = vpow.pop %v575
        %v577 = vmul.f32 %v571, 1.442695
        %v578 = vpow.pop %v577
        %v579 = vmul.f32 %v572, 1.442695
        %v580 = vpow.pop %v579
        %v581 = vld [vmem:[#allocation3] sm:$0xff]
        %v582 = vld [vmem:[#allocation3 + $0x8] sm:$0xff]
        %v583 = vld [vmem:[#allocation3 + $0x10] sm:$0xff]
        %v584 = vld [vmem:[#allocation3 + $0x18] sm:$0xff]
        %v585 = vmul.f32 %v542, %v581
        %v586 = vmul.f32 %v544, %v582
        %v587 = vmul.f32 %v546, %v583
        %v588 = vmul.f32 %v548, %v584
        %v589 = vsel %vm520, %v574, 0.0
        %590 = vadd.xlane.f32.xlu0 %v589
        %v591 = vpop.xlane.xlu0 %590
        %v592 = vsel %vm520, %v576, 0.0
        %593 = vadd.xlane.f32.xlu0 %v592
        %v594 = vpop.xlane.xlu0 %593
        %v595 = vsel %vm520, %v578, 0.0
        %596 = vadd.xlane.f32.xlu0 %v595
        %v597 = vpop.xlane.xlu0 %596
        %v598 = vsel %vm520, %v580, 0.0
        %599 = vadd.xlane.f32.xlu0 %v598
        %v600 = vpop.xlane.xlu0 %599
        %v601 = vadd.f32 %v585, %v591
        %v602 = vadd.f32 %v586, %v594
        %v603 = vadd.f32 %v587, %v597
        %v604 = vadd.f32 %v588, %v600
        %vm605 = vcmask 7168
        %606 = vst.msk [vmem:[#allocation3] sm:$0xff] %vm605, %v601
        %607 = vst.msk [vmem:[#allocation3 + $0x8] sm:$0xff] %vm605, %v602
        %608 = vst.msk [vmem:[#allocation3 + $0x10] sm:$0xff] %vm605, %v603
        %609 = vst.msk [vmem:[#allocation3 + $0x18] sm:$0xff] %vm605, %v604
        %v610 = vld [vmem:[#allocation4] sm:$0xff]
        %v611 = vld [vmem:[#allocation4 + $0x8] sm:$0xff]
        %v612 = vld [vmem:[#allocation4 + $0x10] sm:$0xff]
        %v613 = vld [vmem:[#allocation4 + $0x18] sm:$0xff]
        %615 = vset.pattern.permute.xlu0 0
        %616 = vperm.xlu0 %615, %v542
        %v617 = vpop.permute.xlu0 %616
        %620 = vset.pattern.permute.xlu0 0
        %621 = vperm.xlu0 %620, %v544
        %v622 = vpop.permute.xlu0 %621
        %625 = vset.pattern.permute.xlu0 0
        %626 = vperm.xlu0 %625, %v546
        %v627 = vpop.permute.xlu0 %626
        %630 = vset.pattern.permute.xlu0 0
        %631 = vperm.xlu0 %630, %v548
        %v632 = vpop.permute.xlu0 %631
        %v634 = vmul.f32 %v617, %v610
        %v635 = vmul.f32 %v622, %v611
        %v636 = vmul.f32 %v627, %v612
        %v637 = vmul.f32 %v632, %v613
        %v638 = vpack.c.bf16 %v574, %v574
        %v639 = vpack.c.bf16 %v576, %v576
        %v640 = vpack.c.bf16 %v578, %v578
        %v641 = vpack.c.bf16 %v580, %v580
        %v643 = vsel %vm520, %v638, 0
        %vm645 = vcmask 1043456
        %v647 = vsel %vm645, %v323, 0
        %649 = vmatprep.subr.bf16.mxu0 0
        %650 = vmatpush1.bf16.msra.mxu0 %v647
        %651 = vmatprep.subr.bf16.mxu0 0
        %652 = vmatpush1.bf16.msra.mxu0 0
        %653 = vmatprep.subr.bf16.mxu0 0
        %654 = vmatpush1.bf16.msra.mxu0 0
        %655 = vmatprep.subr.bf16.mxu0 0
        %656 = vmatpush1.bf16.msra.mxu0 0
        %657 = vmatprep.subr.bf16.mxu0 0
        %658 = vmatpush1.bf16.msra.mxu0 0
        %659 = vmatprep.subr.bf16.mxu0 0
        %660 = vmatpush1.bf16.msra.mxu0 0
        %661 = vmatprep.subr.bf16.mxu0 0
        %662 = vmatpush1.bf16.msra.mxu0 0
        %663 = vmatprep.subr.bf16.mxu0 0
        %664 = vmatpush1.bf16.msra.mxu0 0
        %665 = vmatprep.subr.bf16.mxu0 0
        %666 = vmatpush1.bf16.msra.mxu0 0
        %667 = vmatprep.subr.bf16.mxu0 0
        %668 = vmatpush1.bf16.msra.mxu0 0
        %669 = vmatprep.subr.bf16.mxu0 0
        %670 = vmatpush1.bf16.msra.mxu0 0
        %671 = vmatprep.subr.bf16.mxu0 0
        %672 = vmatpush1.bf16.msra.mxu0 0
        %673 = vmatprep.subr.bf16.mxu0 0
        %674 = vmatpush1.bf16.msra.mxu0 0
        %675 = vmatprep.subr.bf16.mxu0 0
        %676 = vmatpush1.bf16.msra.mxu0 0
        %677 = vmatprep.subr.bf16.mxu0 0
        %678 = vmatpush1.bf16.msra.mxu0 0
        %679 = vmatprep.subr.bf16.mxu0 0
        %680 = vmatpush1.bf16.msra.mxu0 0
        %681 = vmatprep.mubr.bf16.mxu0 0
        %682 = vmatmul.mubr.bf16.gmra.mrb[0].mxu0 %v643
        %v683 = vpop.f32.mrb[0].mxu0
        %v684 = vadd.f32 0.0, %v683
        %v685 = vpop.f32.mrb[0].mxu0
        %v686 = vpop.f32.mrb[0].mxu0
        %v687 = vpop.f32.mrb[0].mxu0
        %688 = vdwg.mxu0
        %v690 = vsel %vm520, %v639, 0
        %v693 = vsel %vm645, %v324, 0
        %695 = vmatprep.subr.bf16.mxu0 0
        %696 = vmatpush1.bf16.msra.mxu0 %v693
        %697 = vmatprep.subr.bf16.mxu0 0
        %698 = vmatpush1.bf16.msra.mxu0 0
        %699 = vmatprep.subr.bf16.mxu0 0
        %700 = vmatpush1.bf16.msra.mxu0 0
        %701 = vmatprep.subr.bf16.mxu0 0
        %702 = vmatpush1.bf16.msra.mxu0 0
        %703 = vmatprep.subr.bf16.mxu0 0
        %704 = vmatpush1.bf16.msra.mxu0 0
        %705 = vmatprep.subr.bf16.mxu0 0
        %706 = vmatpush1.bf16.msra.mxu0 0
        %707 = vmatprep.subr.bf16.mxu0 0
        %708 = vmatpush1.bf16.msra.mxu0 0
        %709 = vmatprep.subr.bf16.mxu0 0
        %710 = vmatpush1.bf16.msra.mxu0 0
        %711 = vmatprep.subr.bf16.mxu0 0
        %712 = vmatpush1.bf16.msra.mxu0 0
        %713 = vmatprep.subr.bf16.mxu0 0
        %714 = vmatpush1.bf16.msra.mxu0 0
        %715 = vmatprep.subr.bf16.mxu0 0
        %716 = vmatpush1.bf16.msra.mxu0 0
        %717 = vmatprep.subr.bf16.mxu0 0
        %718 = vmatpush1.bf16.msra.mxu0 0
        %719 = vmatprep.subr.bf16.mxu0 0
        %720 = vmatpush1.bf16.msra.mxu0 0
        %721 = vmatprep.subr.bf16.mxu0 0
        %722 = vmatpush1.bf16.msra.mxu0 0
        %723 = vmatprep.subr.bf16.mxu0 0
        %724 = vmatpush1.bf16.msra.mxu0 0
        %725 = vmatprep.subr.bf16.mxu0 0
        %726 = vmatpush1.bf16.msra.mxu0 0
        %727 = vmatprep.mubr.bf16.mxu0 0
        %728 = vmatmul.mubr.bf16.gmra.mrb[0].mxu0 %v690
        %v729 = vpop.f32.mrb[0].mxu0
        %v730 = vadd.f32 0.0, %v729
        %v731 = vpop.f32.mrb[0].mxu0
        %v732 = vpop.f32.mrb[0].mxu0
        %v733 = vpop.f32.mrb[0].mxu0
        %734 = vdwg.mxu0
        %v736 = vsel %vm520, %v640, 0
        %v739 = vsel %vm645, %v325, 0
        %741 = vmatprep.subr.bf16.mxu0 0
        %742 = vmatpush1.bf16.msra.mxu0 %v739
        %743 = vmatprep.subr.bf16.mxu0 0
        %744 = vmatpush1.bf16.msra.mxu0 0
        %745 = vmatprep.subr.bf16.mxu0 0
        %746 = vmatpush1.bf16.msra.mxu0 0
        %747 = vmatprep.subr.bf16.mxu0 0
        %748 = vmatpush1.bf16.msra.mxu0 0
        %749 = vmatprep.subr.bf16.mxu0 0
        %750 = vmatpush1.bf16.msra.mxu0 0
        %751 = vmatprep.subr.bf16.mxu0 0
        %752 = vmatpush1.bf16.msra.mxu0 0
        %753 = vmatprep.subr.bf16.mxu0 0
        %754 = vmatpush1.bf16.msra.mxu0 0
        %755 = vmatprep.subr.bf16.mxu0 0
        %756 = vmatpush1.bf16.msra.mxu0 0
        %757 = vmatprep.subr.bf16.mxu0 0
        %758 = vmatpush1.bf16.msra.mxu0 0
        %759 = vmatprep.subr.bf16.mxu0 0
        %760 = vmatpush1.bf16.msra.mxu0 0
        %761 = vmatprep.subr.bf16.mxu0 0
        %762 = vmatpush1.bf16.msra.mxu0 0
        %763 = vmatprep.subr.bf16.mxu0 0
        %764 = vmatpush1.bf16.msra.mxu0 0
        %765 = vmatprep.subr.bf16.mxu0 0
        %766 = vmatpush1.bf16.msra.mxu0 0
        %767 = vmatprep.subr.bf16.mxu0 0
        %768 = vmatpush1.bf16.msra.mxu0 0
        %769 = vmatprep.subr.bf16.mxu0 0
        %770 = vmatpush1.bf16.msra.mxu0 0
        %771 = vmatprep.subr.bf16.mxu0 0
        %772 = vmatpush1.bf16.msra.mxu0 0
        %773 = vmatprep.mubr.bf16.mxu0 0
        %774 = vmatmul.mubr.bf16.gmra.mrb[0].mxu0 %v736
        %v775 = vpop.f32.mrb[0].mxu0
        %v776 = vadd.f32 0.0, %v775
        %v777 = vpop.f32.mrb[0].mxu0
        %v778 = vpop.f32.mrb[0].mxu0
        %v779 = vpop.f32.mrb[0].mxu0
        %780 = vdwg.mxu0
        %v782 = vsel %vm520, %v641, 0
        %v785 = vsel %vm645, %v326, 0
        %787 = vmatprep.subr.bf16.mxu0 0
        %788 = vmatpush1.bf16.msra.mxu0 %v785
        %789 = vmatprep.subr.bf16.mxu0 0
        %790 = vmatpush1.bf16.msra.mxu0 0
        %791 = vmatprep.subr.bf16.mxu0 0
        %792 = vmatpush1.bf16.msra.mxu0 0
        %793 = vmatprep.subr.bf16.mxu0 0
        %794 = vmatpush1.bf16.msra.mxu0 0
        %795 = vmatprep.subr.bf16.mxu0 0
        %796 = vmatpush1.bf16.msra.mxu0 0
        %797 = vmatprep.subr.bf16.mxu0 0
        %798 = vmatpush1.bf16.msra.mxu0 0
        %799 = vmatprep.subr.bf16.mxu0 0
        %800 = vmatpush1.bf16.msra.mxu0 0
        %801 = vmatprep.subr.bf16.mxu0 0
        %802 = vmatpush1.bf16.msra.mxu0 0
        %803 = vmatprep.subr.bf16.mxu0 0
        %804 = vmatpush1.bf16.msra.mxu0 0
        %805 = vmatprep.subr.bf16.mxu0 0
        %806 = vmatpush1.bf16.msra.mxu0 0
        %807 = vmatprep.subr.bf16.mxu0 0
        %808 = vmatpush1.bf16.msra.mxu0 0
        %809 = vmatprep.subr.bf16.mxu0 0
        %810 = vmatpush1.bf16.msra.mxu0 0
        %811 = vmatprep.subr.bf16.mxu0 0
        %812 = vmatpush1.bf16.msra.mxu0 0
        %813 = vmatprep.subr.bf16.mxu0 0
        %814 = vmatpush1.bf16.msra.mxu0 0
        %815 = vmatprep.subr.bf16.mxu0 0
        %816 = vmatpush1.bf16.msra.mxu0 0
        %817 = vmatprep.subr.bf16.mxu0 0
        %818 = vmatpush1.bf16.msra.mxu0 0
        %819 = vmatprep.mubr.bf16.mxu0 0
        %820 = vmatmul.mubr.bf16.gmra.mrb[0].mxu0 %v782
        %v821 = vpop.f32.mrb[0].mxu0
        %v822 = vadd.f32 0.0, %v821
        %v823 = vpop.f32.mrb[0].mxu0
        %v824 = vpop.f32.mrb[0].mxu0
        %v825 = vpop.f32.mrb[0].mxu0
        %826 = vdwg.mxu0
        %v827 = vadd.f32 %v634, %v684
        %v828 = vadd.f32 %v635, %v730
        %v829 = vadd.f32 %v636, %v776
        %v830 = vadd.f32 %v637, %v822
        %831 = vst.msk [vmem:[#allocation4] sm:$0xff] %vm327, %v827
        %832 = vst.msk [vmem:[#allocation4 + $0x8] sm:$0xff] %vm327, %v828
        %833 = vst.msk [vmem:[#allocation4 + $0x10] sm:$0xff] %vm327, %v829
        %834 = vst.msk [vmem:[#allocation4 + $0x18] sm:$0xff] %vm327, %v830
        %835 = vst.msk [vmem:[#allocation2] sm:$0xff] %vm605, %v533
        %836 = vst.msk [vmem:[#allocation2 + $0x8] sm:$0xff] %vm605, %v534
        %837 = vst.msk [vmem:[#allocation2 + $0x10] sm:$0xff] %vm605, %v535
        %838 = vst.msk [vmem:[#allocation2 + $0x18] sm:$0xff] %vm605, %v536
        // Predicated region
        $region49: #{transformer_encoder.9} parent=31 // pred_check
          %p839 = pneg %p297
        $region50: #{transformer_encoder.9} parent=31 // pred_check_branch
          %841 = sbr.rel (%p839) target = $region52
        $region51: #{transformer_encoder.9} parent=31 // pred_region
          %v842 = vld [vmem:[#allocation4] sm:$0xff]
          %v843 = vld [vmem:[#allocation4 + $0x8] sm:$0xff]
          %v844 = vld [vmem:[#allocation4 + $0x10] sm:$0xff]
          %v845 = vld [vmem:[#allocation4 + $0x18] sm:$0xff]
          %v846 = vld [vmem:[#allocation3] sm:$0xff]
          %v847 = vld [vmem:[#allocation3 + $0x8] sm:$0xff]
          %v848 = vld [vmem:[#allocation3 + $0x10] sm:$0xff]
          %v849 = vld [vmem:[#allocation3 + $0x18] sm:$0xff]
          %851 = vset.pattern.permute.xlu0 0
          %852 = vperm.xlu0 %851, %v846
          %v853 = vpop.permute.xlu0 %852
          %856 = vset.pattern.permute.xlu0 0
          %857 = vperm.xlu0 %856, %v847
          %v858 = vpop.permute.xlu0 %857
          %861 = vset.pattern.permute.xlu0 0
          %862 = vperm.xlu0 %861, %v848
          %v863 = vpop.permute.xlu0 %862
          %866 = vset.pattern.permute.xlu0 0
          %867 = vperm.xlu0 %866, %v849
          %v868 = vpop.permute.xlu0 %867
          %v870 = vrcp.pop %v853
          %v871 = vmul.f32 %v842, %v870
          %v872 = vrcp.pop %v858
          %v873 = vmul.f32 %v843, %v872
          %v874 = vrcp.pop %v863
          %v875 = vmul.f32 %v844, %v874
          %v876 = vrcp.pop %v868
          %v877 = vmul.f32 %v845, %v876
          %879 = vrot.lane.b32.xlu0 %v873, 32
          %v880 = vpop.permute.xlu0 %879
          %883 = vrot.lane.b32.xlu0 %v875, 64
          %v884 = vpop.permute.xlu0 %883
          %887 = vrot.lane.b32.xlu0 %v877, 96
          %v888 = vpop.permute.xlu0 %887
          %v890 = vsel %vm327, %v871, %v880
          %vm891 = vcmask 523264
          %v892 = vsel %vm891, %v890, %v884
          %vm893 = vcmask 785408
          %v894 = vsel %vm893, %v892, %v888
          %v895 = vpack.c.bf16 %v894, %v894
          %896 = vst [vmem:[%s295] sm:$0xf] %v895
        $region52: #{transformer_encoder.9} parent=31 // pred_fallthru
          _
        %s897 = sand.u32 %s136, 1
        %s898 = scalar_lea.sflag [#allocation7], %s897
        %s899 = sand.u32 %s136, 1
        %s900 = smul.addr %s899, 4
        %s901 = scalar_lea.vmem [#allocation11], %s900
        // Predicated region
        $region53: #{transformer_encoder.9} parent=31 // pred_check
          %p902 = pneg %p146
        $region54: #{transformer_encoder.9} parent=31 // pred_check_branch
          %904 = sbr.rel (%p902) target = $region56
        $region55: #{transformer_encoder.9} parent=31 // pred_region
          %s906 = ssub.s32 64, 64
          %907 = vsyncadd %s898, %s906
          %s908 = sadd.s32 %s29, %s28
          %s909 = smul.addr %s908, 64
          %s910 = scalar_lea.hbm %s3, %s909
          %s912 = sshll.u32 %s901, 4
          %s913 = int_to_ptr.vmem [resolvable:$true] %s912
          %915 = dma.vmem_to_hbm [thread:$0]  %s913, 64, %s910, %s898
        $region56: #{transformer_encoder.9} parent=31 // pred_fallthru
          _
      $region32: #{transformer_encoder.9} parent=5 // pred_fallthru
        _
      %p916 = scmp.le.s32.totalorder 2, %s18
      // Predicated region
      $region57: #{transformer_encoder.9} parent=5 // pred_check
        %p917 = pneg %p916
      $region58: #{transformer_encoder.9} parent=5 // pred_check_branch
        %919 = sbr.rel (%p917) target = $region60
      $region59: #{transformer_encoder.9} parent=5 // pred_region
        %s920 = ssub.s32 %s18, 2
        // Predicated region
        $region61: #{transformer_encoder.9} parent=59 // pred_check
          %p921 = pneg %p152
        $region62: #{transformer_encoder.9} parent=59 // pred_check_branch
          %923 = sbr.rel (%p921) target = $region64
        $region63: #{transformer_encoder.9} parent=59 // pred_region
          %s924 = sand.u32 %s137, 1
          %s925 = scalar_lea.sflag [#allocation7], %s924
          %s926 = sand.u32 %s137, 1
          %s927 = smul.addr %s926, 4
          %s928 = scalar_lea.vmem [#allocation11], %s927
          %929 = dma.done %s925, 64
        $region64: #{transformer_encoder.9} parent=59 // pred_fallthru
          _
      $region60: #{transformer_encoder.9} parent=5 // pred_fallthru
        _
    $region6: #{transformer_encoder.9} parent=1 // loop_footer
      %s22 = sadd.s32 1, %s18
    $region7: #{transformer_encoder.9} parent=1 // loop_footer_branch
      %17 = sbr.rel target = $region3
    $region8: #{transformer_encoder.9} parent=1 // loop_exit
      _
    %930 = vsyncpa [#allocation6], 1
    %s931 = scalar_lea.sflag [#allocation6], 1
    %932 = vsyncpa %s931, 1
    %933 = vsyncpa [#allocation9], 1
    %s934 = scalar_lea.sflag [#allocation9], 1
    %935 = vsyncpa %s934, 1
    %936 = vsyncpa [#allocation7], 1
    %s937 = scalar_lea.sflag [#allocation7], 1
    %938 = vsyncpa %s937, 1

// kernel: transformer_encoder.11
$region0: #{transformer_encoder.11}
  #allocation0 [shape = 'u32[]', space=smem, size = 0x4, offset = 0x4, fixed_abs, tag = 'smem constant byte address 0x4 - core index']
  #allocation1 [shape = 'u32[144,128]{1,0:T(1,128)}', space=vmem, size = 0x12000, scoped, tag = 'internal scratch']
  #allocation2 [shape = 'f32[16,32]{1,0:T(8,128)}', space=vmem, size = 0x2000, scoped, tag = 'scratch operand']
  %s0 = inlined_call_operand.hbm [shape: bf16[16,32], index: 0, kind: input, shape index: {}]
  %s1 = inlined_call_operand.hbm [shape: bf16[32,64], index: 1, kind: input, shape index: {}]
  %s2 = inlined_call_operand.hbm [shape: f32[1,64], index: 2, kind: input, shape index: {}]
  %s3 = inlined_call_operand.hbm [shape: bf16[64,32], index: 3, kind: input, shape index: {}]
  %s4 = inlined_call_operand.hbm [shape: f32[1,32], index: 4, kind: input, shape index: {}]
  %s5 = inlined_call_operand.hbm [shape: f32[1,32], index: 5, kind: input, shape index: {}]
  %s6 = inlined_call_operand.hbm [shape: f32[1,32], index: 6, kind: input, shape index: {}]
  %s7 = inlined_call_operand.hbm [shape: bf16[16,32], index: 7, kind: output, shape index: {}]
  %s8 = sld [smem:[#allocation0]]
  $region74: #{transformer_encoder.11} parent=0
    _
  %s10 = ssub.s32 1, %s8
  %s11 = scalar_select 0, %s10, %s8
  $region1: #{transformer_encoder.11} parent=0
    #allocation3 [shape = 'u8[4096]{0}', space=vmem, size = 0x1000, scoped, tag = 'input window, operand 0, single buffered']
    #allocation4 [shape = 's32[1]{0}', space=sflag, size = 0x4, scoped, tag = 'scoped memory for transformer_encoder.11']
    #allocation5 [shape = 's32[1]{0}', space=sflag, size = 0x4, scoped, tag = 'scoped memory for transformer_encoder.11']
    #allocation6 [shape = 'u8[8192]{0}', space=vmem, size = 0x2000, scoped, tag = 'input window, operand 1, single buffered']
    #allocation7 [shape = 's32[1]{0}', space=sflag, size = 0x4, scoped, tag = 'scoped memory for transformer_encoder.11']
    #allocation8 [shape = 'u8[512]{0}', space=vmem, size = 0x400, scoped, tag = 'input window, operand 2, single buffered']
    #allocation9 [shape = 'u8[16384]{0}', space=vmem, size = 0x4000, scoped, tag = 'input window, operand 3, single buffered']
    #allocation10 [shape = 's32[1]{0}', space=sflag, size = 0x4, scoped, tag = 'scoped memory for transformer_encoder.11']
    #allocation11 [shape = 'u8[512]{0}', space=vmem, size = 0x400, scoped, tag = 'input window, operand 4, single buffered']
    #allocation12 [shape = 'u8[512]{0}', space=vmem, size = 0x400, scoped, tag = 'input window, operand 5, single buffered']
    #allocation13 [shape = 's32[1]{0}', space=sflag, size = 0x4, scoped, tag = 'scoped memory for transformer_encoder.11']
    #allocation14 [shape = 'u8[512]{0}', space=vmem, size = 0x400, scoped, tag = 'input window, operand 6, single buffered']
    #allocation15 [shape = 'u8[4096]{0}', space=vmem, size = 0x1000, scoped, tag = 'output window, operand 0, single buffered']
    %12 = vsyncpa [#allocation4], 0
    %13 = vsyncpa [#allocation7], 0
    %14 = vsyncpa [#allocation10], 0
    %15 = vsyncpa [#allocation13], 0
    %16 = vsyncpa [#allocation5], 0
    // Predicated region
    $region2: #{transformer_encoder.11} parent=1 // pred_check
      _
    $region3: #{transformer_encoder.11} parent=1 // pred_check_branch
      %18 = sbr.rel (0) target = $region5
    $region4: #{transformer_encoder.11} parent=1 // pred_region
      %s20 = ssub.s32 128, 128
      %21 = vsyncadd [#allocation4], %s20
      %s22 = sshll.u32 [#allocation3], 4
      %s23 = int_to_ptr.vmem [resolvable:$true] %s22
      %28 = dma.hbm_to_vmem [thread:$0]  %s0, 128, %s23, [#allocation4], 64, 64, 4
    $region5: #{transformer_encoder.11} parent=1 // pred_fallthru
      _
    // Predicated region
    $region6: #{transformer_encoder.11} parent=1 // pred_check
      _
    $region7: #{transformer_encoder.11} parent=1 // pred_check_branch
      %30 = sbr.rel (0) target = $region9
    $region8: #{transformer_encoder.11} parent=1 // pred_region
      %s32 = ssub.s32 256, 256
      %33 = vsyncadd [#allocation7], %s32
      %s34 = sshll.u32 [#allocation6], 4
      %s35 = int_to_ptr.vmem [resolvable:$true] %s34
      %40 = dma.hbm_to_vmem [thread:$0]  %s1, 256, %s35, [#allocation7], 64, 64, 4
    $region9: #{transformer_encoder.11} parent=1 // pred_fallthru
      _
    // Predicated region
    $region10: #{transformer_encoder.11} parent=1 // pred_check
      _
    $region11: #{transformer_encoder.11} parent=1 // pred_check_branch
      %42 = sbr.rel (0) target = $region13
    $region12: #{transformer_encoder.11} parent=1 // pred_region
      %s44 = ssub.s32 16, 16
      %45 = vsyncadd [#allocation7], %s44
      %s47 = sshll.u32 [#allocation8], 4
      %s48 = int_to_ptr.vmem [resolvable:$true] %s47
      %50 = dma.hbm_to_vmem [thread:$0]  %s2, 16, %s48, [#allocation7]
    $region13: #{transformer_encoder.11} parent=1 // pred_fallthru
      _
    // Predicated region
    $region14: #{transformer_encoder.11} parent=1 // pred_check
      _
    $region15: #{transformer_encoder.11} parent=1 // pred_check_branch
      %52 = sbr.rel (0) target = $region17
    $region16: #{transformer_encoder.11} parent=1 // pred_region
      %s54 = ssub.s32 512, 512
      %55 = vsyncadd [#allocation10], %s54
      %s56 = sshll.u32 [#allocation9], 4
      %s57 = int_to_ptr.vmem [resolvable:$true] %s56
      %62 = dma.hbm_to_vmem [thread:$0]  %s3, 512, %s57, [#allocation10], 64, 64, 4
    $region17: #{transformer_encoder.11} parent=1 // pred_fallthru
      _
    // Predicated region
    $region18: #{transformer_encoder.11} parent=1 // pred_check
      _
    $region19: #{transformer_encoder.11} parent=1 // pred_check_branch
      %64 = sbr.rel (0) target = $region21
    $region20: #{transformer_encoder.11} parent=1 // pred_region
      %s66 = ssub.s32 16, 16
      %67 = vsyncadd [#allocation10], %s66
      %s69 = sshll.u32 [#allocation11], 4
      %s70 = int_to_ptr.vmem [resolvable:$true] %s69
      %72 = dma.hbm_to_vmem [thread:$0]  %s4, 16, %s70, [#allocation10]
    $region21: #{transformer_encoder.11} parent=1 // pred_fallthru
      _
    // Predicated region
    $region22: #{transformer_encoder.11} parent=1 // pred_check
      _
    $region23: #{transformer_encoder.11} parent=1 // pred_check_branch
      %74 = sbr.rel (0) target = $region25
    $region24: #{transformer_encoder.11} parent=1 // pred_region
      %s76 = ssub.s32 16, 16
      %77 = vsyncadd [#allocation13], %s76
      %s79 = sshll.u32 [#allocation12], 4
      %s80 = int_to_ptr.vmem [resolvable:$true] %s79
      %82 = dma.hbm_to_vmem [thread:$0]  %s5, 16, %s80, [#allocation13]
    $region25: #{transformer_encoder.11} parent=1 // pred_fallthru
      _
    // Predicated region
    $region26: #{transformer_encoder.11} parent=1 // pred_check
      _
    $region27: #{transformer_encoder.11} parent=1 // pred_check_branch
      %84 = sbr.rel (0) target = $region29
    $region28: #{transformer_encoder.11} parent=1 // pred_region
      %s86 = ssub.s32 16, 16
      %87 = vsyncadd [#allocation13], %s86
      %s89 = sshll.u32 [#allocation14], 4
      %s90 = int_to_ptr.vmem [resolvable:$true] %s89
      %92 = dma.hbm_to_vmem [thread:$0]  %s6, 16, %s90, [#allocation13]
    $region29: #{transformer_encoder.11} parent=1 // pred_fallthru
      _
    // Predicated region
    $region30: #{transformer_encoder.11} parent=1 // pred_check
      _
    $region31: #{transformer_encoder.11} parent=1 // pred_check_branch
      %94 = sbr.rel (0) target = $region33
    $region32: #{transformer_encoder.11} parent=1 // pred_region
      %95 = dma.done [#allocation4], 128
    $region33: #{transformer_encoder.11} parent=1 // pred_fallthru
      _
    // Predicated region
    $region34: #{transformer_encoder.11} parent=1 // pred_check
      _
    $region35: #{transformer_encoder.11} parent=1 // pred_check_branch
      %97 = sbr.rel (0) target = $region37
    $region36: #{transformer_encoder.11} parent=1 // pred_region
      %98 = dma.done [#allocation7], 256
    $region37: #{transformer_encoder.11} parent=1 // pred_fallthru
      _
    // Predicated region
    $region38: #{transformer_encoder.11} parent=1 // pred_check
      _
    $region39: #{transformer_encoder.11} parent=1 // pred_check_branch
      %100 = sbr.rel (0) target = $region41
    $region40: #{transformer_encoder.11} parent=1 // pred_region
      %101 = dma.done [#allocation7], 16
    $region41: #{transformer_encoder.11} parent=1 // pred_fallthru
      _
    // Predicated region
    $region42: #{transformer_encoder.11} parent=1 // pred_check
      _
    $region43: #{transformer_encoder.11} parent=1 // pred_check_branch
      %103 = sbr.rel (0) target = $region45
    $region44: #{transformer_encoder.11} parent=1 // pred_region
      %104 = dma.done [#allocation10], 512
    $region45: #{transformer_encoder.11} parent=1 // pred_fallthru
      _
    // Predicated region
    $region46: #{transformer_encoder.11} parent=1 // pred_check
      _
    $region47: #{transformer_encoder.11} parent=1 // pred_check_branch
      %106 = sbr.rel (0) target = $region49
    $region48: #{transformer_encoder.11} parent=1 // pred_region
      %107 = dma.done [#allocation10], 16
    $region49: #{transformer_encoder.11} parent=1 // pred_fallthru
      _
    // Predicated region
    $region50: #{transformer_encoder.11} parent=1 // pred_check
      _
    $region51: #{transformer_encoder.11} parent=1 // pred_check_branch
      %109 = sbr.rel (0) target = $region53
    $region52: #{transformer_encoder.11} parent=1 // pred_region
      %110 = dma.done [#allocation13], 16
    $region53: #{transformer_encoder.11} parent=1 // pred_fallthru
      _
    // Predicated region
    $region54: #{transformer_encoder.11} parent=1 // pred_check
      _
    $region55: #{transformer_encoder.11} parent=1 // pred_check_branch
      %112 = sbr.rel (0) target = $region57
    $region56: #{transformer_encoder.11} parent=1 // pred_region
      %113 = dma.done [#allocation13], 16
    $region57: #{transformer_encoder.11} parent=1 // pred_fallthru
      _
    %p115 = scmp.eq.s32.totalorder 0, 0
    // Predicated region
    $region58: #{transformer_encoder.11} parent=1 // pred_check
      %p116 = pneg %p115
    $region59: #{transformer_encoder.11} parent=1 // pred_check_branch
      %118 = sbr.rel (%p116) target = $region61
    $region60: #{transformer_encoder.11} parent=1 // pred_region
      %v119 = vld [vmem:[#allocation3] sm:$0xf]
      %v120 = vld [vmem:[#allocation3 + $0x4] sm:$0xf]
      %v121 = vunpack.c.l.bf16 %v119
      %v122 = vunpack.c.l.bf16 %v120
      %v123 = vld [vmem:[#allocation11] sm:$0x1]
      %v125 = vlaneseq
      %v126 = vshrl.u32 %v125, 7
      %v127 = vsub.s32 0, %v126
      %v128 = vrot.slane %v123, %v127
      %v130 = vadd.f32 %v121, %v128
      %v131 = vadd.f32 %v122, %v128
      %vm132 = vcmask 261120
      %133 = vst.msk [vmem:[#allocation2] sm:$0xff] %vm132, %v130
      %134 = vst.msk [vmem:[#allocation2 + $0x8] sm:$0xff] %vm132, %v131
    $region61: #{transformer_encoder.11} parent=1 // pred_fallthru
      _
    %v135 = vld [vmem:[#allocation3] sm:$0xf]
    %v136 = vld [vmem:[#allocation3 + $0x4] sm:$0xf]
    %v137 = vld [vmem:[#allocation6] sm:$0xf]
    %v138 = vld [vmem:[#allocation6 + $0x4] sm:$0xf]
    %v139 = vld [vmem:[#allocation6 + $0x8] sm:$0xf]
    %v140 = vld [vmem:[#allocation6 + $0xc] sm:$0xf]
    %v141 = vld [vmem:[#allocation8] sm:$0x1]
    %v143 = vlaneseq
    %v144 = vshrl.u32 %v143, 7
    %v145 = vsub.s32 0, %v144
    %v146 = vrot.slane %v141, %v145
    %v150 = vunpack.c.l.b16 %v135
    %v151 = vunpack.c.l.b16 %v136
    %v152 = vpack.c.b16 %v151, %v150
    %v157 = vunpack.c.l.b16 %v137
    %v158 = vunpack.c.l.b16 %v138
    %v159 = vunpack.c.l.b16 %v139
    %v160 = vunpack.c.l.b16 %v140
    %v161 = vpack.c.b16 %v158, %v157
    %v162 = vpack.c.b16 %v160, %v159
    %vm165 = vcmask 261120
    %v167 = vsel %vm165, %v152, 0
    %169 = vmatprep.subr.bf16.mxu0 0
    %170 = vmatpush1.bf16.msra.mxu0 %v161
    %171 = vmatprep.subr.bf16.mxu0 0
    %172 = vmatpush1.bf16.msra.mxu0 %v162
    %173 = vmatprep.subr.bf16.mxu0 0
    %174 = vmatpush1.bf16.msra.mxu0 0
    %175 = vmatprep.subr.bf16.mxu0 0
    %176 = vmatpush1.bf16.msra.mxu0 0
    %177 = vmatprep.subr.bf16.mxu0 0
    %178 = vmatpush1.bf16.msra.mxu0 0
    %179 = vmatprep.subr.bf16.mxu0 0
    %180 = vmatpush1.bf16.msra.mxu0 0
    %181 = vmatprep.subr.bf16.mxu0 0
    %182 = vmatpush1.bf16.msra.mxu0 0
    %183 = vmatprep.subr.bf16.mxu0 0
    %184 = vmatpush1.bf16.msra.mxu0 0
    %185 = vmatprep.subr.bf16.mxu0 0
    %186 = vmatpush1.bf16.msra.mxu0 0
    %187 = vmatprep.subr.bf16.mxu0 0
    %188 = vmatpush1.bf16.msra.mxu0 0
    %189 = vmatprep.subr.bf16.mxu0 0
    %190 = vmatpush1.bf16.msra.mxu0 0
    %191 = vmatprep.subr.bf16.mxu0 0
    %192 = vmatpush1.bf16.msra.mxu0 0
    %193 = vmatprep.subr.bf16.mxu0 0
    %194 = vmatpush1.bf16.msra.mxu0 0
    %195 = vmatprep.subr.bf16.mxu0 0
    %196 = vmatpush1.bf16.msra.mxu0 0
    %197 = vmatprep.subr.bf16.mxu0 0
    %198 = vmatpush1.bf16.msra.mxu0 0
    %199 = vmatprep.subr.bf16.mxu0 0
    %200 = vmatpush1.bf16.msra.mxu0 0
    %201 = vmatprep.mubr.bf16.mxu0 0
    %202 = vmatmul.mubr.bf16.gmra.mrb[0].mxu0 %v167
    %v203 = vpop.f32.mrb[0].mxu0
    %v204 = vadd.f32 %v146, %v203
    %v205 = vpop.f32.mrb[0].mxu0
    %v206 = vpop.f32.mrb[0].mxu0
    %v207 = vadd.f32 %v146, %v206
    %v208 = vpop.f32.mrb[0].mxu0
    %209 = vdwg.mxu0
    %v210 = vmax.f32 %v204, 0.0
    %v211 = vmax.f32 %v207, 0.0
    %v212 = vld [vmem:[#allocation2] sm:$0xff]
    %v213 = vld [vmem:[#allocation2 + $0x8] sm:$0xff]
    %v214 = vpack.c.bf16 %v211, %v210
    %v215 = vld [vmem:[#allocation9] sm:$0xf]
    %v216 = vld [vmem:[#allocation9 + $0x4] sm:$0xf]
    %v217 = vld [vmem:[#allocation9 + $0x8] sm:$0xf]
    %v218 = vld [vmem:[#allocation9 + $0xc] sm:$0xf]
    %v219 = vld [vmem:[#allocation9 + $0x10] sm:$0xf]
    %v220 = vld [vmem:[#allocation9 + $0x14] sm:$0xf]
    %v221 = vld [vmem:[#allocation9 + $0x18] sm:$0xf]
    %v222 = vld [vmem:[#allocation9 + $0x1c] sm:$0xf]
    %v231 = vunpack.c.l.b16 %v215
    %v232 = vunpack.c.l.b16 %v216
    %v233 = vunpack.c.l.b16 %v217
    %v234 = vunpack.c.l.b16 %v218
    %v235 = vunpack.c.l.b16 %v219
    %v236 = vunpack.c.l.b16 %v220
    %v237 = vunpack.c.l.b16 %v221
    %v238 = vunpack.c.l.b16 %v222
    %v239 = vpack.c.b16 %v232, %v231
    %v240 = vpack.c.b16 %v234, %v233
    %v241 = vpack.c.b16 %v236, %v235
    %v242 = vpack.c.b16 %v238, %v237
    %vm247 = vcmask 523264
    %v249 = vsel %vm247, %v214, 0
    %251 = vmatprep.subr.bf16.mxu0 0
    %252 = vmatpush1.bf16.msra.mxu0 %v239
    %253 = vmatprep.subr.bf16.mxu0 0
    %254 = vmatpush1.bf16.msra.mxu0 %v240
    %255 = vmatprep.subr.bf16.mxu0 0
    %256 = vmatpush1.bf16.msra.mxu0 %v241
    %257 = vmatprep.subr.bf16.mxu0 0
    %258 = vmatpush1.bf16.msra.mxu0 %v242
    %259 = vmatprep.subr.bf16.mxu0 0
    %260 = vmatpush1.bf16.msra.mxu0 0
    %261 = vmatprep.subr.bf16.mxu0 0
    %262 = vmatpush1.bf16.msra.mxu0 0
    %263 = vmatprep.subr.bf16.mxu0 0
    %264 = vmatpush1.bf16.msra.mxu0 0
    %265 = vmatprep.subr.bf16.mxu0 0
    %266 = vmatpush1.bf16.msra.mxu0 0
    %267 = vmatprep.subr.bf16.mxu0 0
    %268 = vmatpush1.bf16.msra.mxu0 0
    %269 = vmatprep.subr.bf16.mxu0 0
    %270 = vmatpush1.bf16.msra.mxu0 0
    %271 = vmatprep.subr.bf16.mxu0 0
    %272 = vmatpush1.bf16.msra.mxu0 0
    %273 = vmatprep.subr.bf16.mxu0 0
    %274 = vmatpush1.bf16.msra.mxu0 0
    %275 = vmatprep.subr.bf16.mxu0 0
    %276 = vmatpush1.bf16.msra.mxu0 0
    %277 = vmatprep.subr.bf16.mxu0 0
    %278 = vmatpush1.bf16.msra.mxu0 0
    %279 = vmatprep.subr.bf16.mxu0 0
    %280 = vmatpush1.bf16.msra.mxu0 0
    %281 = vmatprep.subr.bf16.mxu0 0
    %282 = vmatpush1.bf16.msra.mxu0 0
    %283 = vmatprep.mubr.bf16.mxu0 0
    %284 = vmatmul.mubr.bf16.gmra.mrb[0].mxu0 %v249
    %v285 = vpop.f32.mrb[0].mxu0
    %v286 = vadd.f32 0.0, %v285
    %v287 = vpop.f32.mrb[0].mxu0
    %v288 = vpop.f32.mrb[0].mxu0
    %v289 = vadd.f32 0.0, %v288
    %v290 = vpop.f32.mrb[0].mxu0
    %291 = vdwg.mxu0
    %v292 = vadd.f32 %v212, %v286
    %v293 = vadd.f32 %v213, %v289
    %294 = vst.msk [vmem:[#allocation2] sm:$0xff] %vm165, %v292
    %295 = vst.msk [vmem:[#allocation2 + $0x8] sm:$0xff] %vm165, %v293
    // Predicated region
    $region62: #{transformer_encoder.11} parent=1 // pred_check
      %p296 = pneg %p115
    $region63: #{transformer_encoder.11} parent=1 // pred_check_branch
      %298 = sbr.rel (%p296) target = $region65
    $region64: #{transformer_encoder.11} parent=1 // pred_region
      %v299 = vld [vmem:[#allocation2] sm:$0xff]
      %v300 = vld [vmem:[#allocation2 + $0x8] sm:$0xff]
      %v301 = vsel %vm165, %v299, 0.0
      %302 = vadd.xlane.f32.xlu0 %v301
      %v303 = vpop.xlane.xlu0 %302
      %v304 = vsel %vm165, %v300, 0.0
      %305 = vadd.xlane.f32.xlu0 %v304
      %v306 = vpop.xlane.xlu0 %305
      %v307 = vrcp.pop 32.0
      %v308 = vmul.f32 %v303, %v307
      %v309 = vmul.f32 %v306, %v307
      %v310 = vsub.f32 %v299, %v308
      %v311 = vsub.f32 %v300, %v309
      %v312 = vmul.f32 %v310, %v310
      %v313 = vmul.f32 %v311, %v311
      %v314 = vsel %vm165, %v312, 0.0
      %315 = vadd.xlane.f32.xlu0 %v314
      %v316 = vpop.xlane.xlu0 %315
      %v317 = vsel %vm165, %v313, 0.0
      %318 = vadd.xlane.f32.xlu0 %v317
      %v319 = vpop.xlane.xlu0 %318
      %v320 = vmul.f32 %v316, %v307
      %v321 = vmul.f32 %v319, %v307
      %v322 = vadd.f32 %v320, 1e-05
      %v323 = vadd.f32 %v321, 1e-05
      %v324 = vrsqrt.pop %v322
      %v325 = vrsqrt.pop %v323
      %v326 = vmul.f32 %v310, %v324
      %v327 = vmul.f32 %v311, %v325
      %v328 = vld [vmem:[#allocation12] sm:$0x1]
      %v330 = vlaneseq
      %v331 = vshrl.u32 %v330, 7
      %v332 = vsub.s32 0, %v331
      %v333 = vrot.slane %v328, %v332
      %v335 = vmul.f32 %v326, %v333
      %v336 = vmul.f32 %v327, %v333
      %v337 = vld [vmem:[#allocation14] sm:$0x1]
      %v339 = vlaneseq
      %v340 = vshrl.u32 %v339, 7
      %v341 = vsub.s32 0, %v340
      %v342 = vrot.slane %v337, %v341
      %v344 = vadd.f32 %v335, %v342
      %v345 = vadd.f32 %v336, %v342
      %v346 = vpack.c.bf16 %v345, %v344
      %v348 = vunpack.c.l.b16 %v346
      %v349 = vunpack.c.h.b16 %v346
      %v350 = vpack.c.b16 %v348, %v348
      %v351 = vpack.c.b16 %v349, %v349
      %vm354 = vcmask 257024
      %355 = vst.msk [vmem:[#allocation15] sm:$0xf] %vm354, %v350
      %356 = vst.msk [vmem:[#allocation15 + $0x4] sm:$0xf] %vm354, %v351
    $region65: #{transformer_encoder.11} parent=1 // pred_fallthru
      _
    // Predicated region
    $region66: #{transformer_encoder.11} parent=1 // pred_check
      _
    $region67: #{transformer_encoder.11} parent=1 // pred_check_branch
      %358 = sbr.rel (0) target = $region69
    $region68: #{transformer_encoder.11} parent=1 // pred_region
      %s360 = ssub.s32 128, 128
      %361 = vsyncadd [#allocation5], %s360
      %s362 = sshll.u32 [#allocation15], 4
      %s363 = int_to_ptr.vmem [resolvable:$true] %s362
      %368 = dma.vmem_to_hbm [thread:$0]  %s363, 128, %s7, [#allocation5], 64, 64, 4
    $region69: #{transformer_encoder.11} parent=1 // pred_fallthru
      _
    // Predicated region
    $region70: #{transformer_encoder.11} parent=1 // pred_check
      _
    $region71: #{transformer_encoder.11} parent=1 // pred_check_branch
      %370 = sbr.rel (0) target = $region73
    $region72: #{transformer_encoder.11} parent=1 // pred_region
      %371 = dma.done [#allocation5], 128
    $region73: #{transformer_encoder.11} parent=1 // pred_fallthru
      _
    %372 = vsyncpa [#allocation4], 1
    %373 = vsyncpa [#allocation7], 1
    %374 = vsyncpa [#allocation10], 1
    %375 = vsyncpa [#allocation13], 1
    %376 = vsyncpa [#allocation5], 1

</llo_original>
